<compile_context>
chip_gen: v5e
topology: v5e:2x2
jax: 0.10.0
libtpu: 0.0.40
codegen_flags: <defaults>
</compile_context>

<pallas_src>
import functools

import jax
import jax.numpy as jnp
from jax.experimental import pallas as pl
from jax.experimental.pallas import tpu as pltpu


def attention_kernel(enc_ref, hid_ref, w_enc_ref, w_hid_ref, b_ref, v_ref,
                     mask_ref, out_ref, *, block_batch, enc_dim):
    # enc_ref  : (S, TB*2De)  compute dtype  (native (S,B,2De) layout, last dims merged)
    # hid_ref  : (TB, Dd)     compute dtype
    # w_enc_ref: (Dd, 2De)    compute dtype  (PyTorch (out, in) orientation)
    # w_hid_ref: (Dd, Dd)     compute dtype
    # b_ref    : (Dd, 1)      float32
    # v_ref    : (Dd, 1)      float32
    # mask_ref : (TB, S)      int32
    # out_ref  : (TB, S)      float32
    contract_last = (((1,), (1,)), ((), ()))  # contract last dim of both operands

    # Hidden-side projection for the whole batch tile: (Dd, TB), bias folded in.
    hid_proj = jax.lax.dot_general(
        w_hid_ref[...], hid_ref[...], dimension_numbers=contract_last,
        preferred_element_type=jnp.float32) + b_ref[...]

    w_enc = w_enc_ref[...]          # hoisted out of the unrolled loop
    v_col = v_ref[...]              # (Dd, 1) f32

    for t in range(block_batch):    # static unroll over the batch tile
        enc_t = enc_ref[:, pl.ds(t * enc_dim, enc_dim)]           # (S, 2De)
        # energy kept transposed, (Dd, S), so the score comes out lane-dense.
        energy_t = jnp.tanh(
            jax.lax.dot_general(w_enc, enc_t,
                                dimension_numbers=contract_last,
                                preferred_element_type=jnp.float32)
            + hid_proj[:, t:t + 1])                               # (Dd, S) f32
        # v-projection: VPU multiply + XLU sublane reduce (no N=1 MXU matvec).
        score = jnp.sum(energy_t * v_col, axis=0, keepdims=True)  # (1, S)
        masked = jnp.where(mask_ref[pl.ds(t, 1), :] == 0,
                           jnp.float32(-1e10), score)
        m = jnp.max(masked, axis=-1, keepdims=True)
        e = jnp.exp(masked - m)
        denom = jnp.sum(e, axis=-1, keepdims=True)
        out_ref[pl.ds(t, 1), :] = e * pl.reciprocal(denom, approx=True)


def _pick_block_batch(batch, enc_dim, max_block=32):
    """Batch-tile size TB: must divide `batch`, be a multiple of 8 (sublane width for
    the (TB, .) blocks) and make TB*enc_dim a multiple of 128 lanes (lane-aligned
    encoder slab).  Prefer the largest TB that still leaves >= 2 grid blocks (v7x has
    two TensorCores) and a modest VMEM footprint; otherwise fall back to the full
    batch (full-dim blocks are always legal)."""
    best = None
    for tb in range(8, min(batch // 2, max_block) + 1, 8):
        if batch % tb == 0 and (tb * enc_dim) % 128 == 0:
            best = tb
    return best if best is not None else batch


def attention_forward(hidden, encoder_outputs, mask, w_attn, b_attn, v_w,
                      *, compute_dtype=jnp.bfloat16, block_batch=None):
    """hidden: (B, Dd), encoder_outputs: (S, B, 2*De), mask: (B, S).
    w_attn: (Dd, Dd + 2*De) PyTorch-style (out, in); b_attn: (Dd,); v_w: (1, Dd).
    Returns the attention weights, shape (B, S), float32."""
    src_len, batch, enc_dim = encoder_outputs.shape
    dec_hid = hidden.shape[1]

    if block_batch is None:
        block_batch = _pick_block_batch(batch, enc_dim)
    if batch % block_batch != 0:
        raise ValueError("block_batch must divide batch")
    num_blocks = batch // block_batch

    # Split the fused attn Linear; cat order in the reference is (hidden, encoder).
    w_hid = w_attn[:, :dec_hid].astype(compute_dtype)          # (Dd, Dd)
    w_enc = w_attn[:, dec_hid:].astype(compute_dtype)          # (Dd, 2De)
    b_col = b_attn.astype(jnp.float32)[:, None]                # (Dd, 1)
    v_col = jnp.transpose(v_w).astype(jnp.float32)             # (Dd, 1)

    # Keep encoder_outputs in its native (S, B, 2De) layout; merging the trailing dims
    # is a free (bitcast) reshape -- no HBM transpose round-trip.
    enc2d = encoder_outputs.astype(compute_dtype).reshape(src_len, batch * enc_dim)
    hid_c = hidden.astype(compute_dtype)                       # (B, Dd)
    mask_i = mask.astype(jnp.int32)                            # (B, S)

    kernel = functools.partial(attention_kernel,
                               block_batch=block_batch, enc_dim=enc_dim)

    return pl.pallas_call(
        kernel,
        out_shape=jax.ShapeDtypeStruct((batch, src_len), jnp.float32),
        grid_spec=pltpu.PrefetchScalarGridSpec(
            num_scalar_prefetch=0,
            grid=(num_blocks,),
            in_specs=[
                pl.BlockSpec((src_len, block_batch * enc_dim), lambda i: (0, i)),
                pl.BlockSpec((block_batch, dec_hid), lambda i: (i, 0)),
                pl.BlockSpec((dec_hid, enc_dim), lambda i: (0, 0)),
                pl.BlockSpec((dec_hid, dec_hid), lambda i: (0, 0)),
                pl.BlockSpec((dec_hid, 1), lambda i: (0, 0)),
                pl.BlockSpec((dec_hid, 1), lambda i: (0, 0)),
                pl.BlockSpec((block_batch, src_len), lambda i: (i, 0)),
            ],
            out_specs=pl.BlockSpec((block_batch, src_len), lambda i: (i, 0)),
        ),
        compiler_params=pltpu.CompilerParams(
            dimension_semantics=("parallel",),
        ),
    )(enc2d, hid_c, w_enc, w_hid, b_col, v_col, mask_i)


def reference_forward(hidden, encoder_outputs, mask, w_attn, b_attn, v_w):
    """Pure-JAX reference mirroring the PyTorch forward."""
    src_len = encoder_outputs.shape[0]
    enc_bt = jnp.transpose(encoder_outputs, (1, 0, 2))
    hid = jnp.repeat(hidden[:, None, :], src_len, axis=1)
    energy = jnp.tanh(jnp.concatenate([hid, enc_bt], axis=2) @ w_attn.T + b_attn)
    att = (energy @ v_w.T)[:, :, 0]
    att = jnp.where(mask == 0, -1e10, att)
    return jax.nn.softmax(att, axis=1)


if __name__ == "__main__":
    # Small shapes consistent with the module.
    enc_hid_dim, dec_hid_dim = 16, 32
    batch, src_len = 16, 12                       # -> TB=8, grid=(2,)
    in_dim = enc_hid_dim * 2 + dec_hid_dim

    key = jax.random.PRNGKey(0)
    k1, k2, k3, k4, k5, k6 = jax.random.split(key, 6)

    # nn.Linear-style deterministic init.
    bound_attn = 1.0 / jnp.sqrt(jnp.float32(in_dim))
    w_attn = jax.random.uniform(k1, (dec_hid_dim, in_dim), jnp.float32,
                                -bound_attn, bound_attn)
    b_attn = jax.random.uniform(k2, (dec_hid_dim,), jnp.float32,
                                -bound_attn, bound_attn)
    bound_v = 1.0 / jnp.sqrt(jnp.float32(dec_hid_dim))
    v_w = jax.random.uniform(k3, (1, dec_hid_dim), jnp.float32, -bound_v, bound_v)

    # Inputs; mask has 1 for valid positions, 0 for padding (>=1 valid per row).
    hidden = jax.random.normal(k4, (batch, dec_hid_dim), jnp.float32)
    encoder_outputs = jax.random.normal(k5, (src_len, batch, enc_hid_dim * 2),
                                        jnp.float32)
    lengths = jax.random.randint(k6, (batch,), 1, src_len + 1)
    mask = (jnp.arange(src_len)[None, :] < lengths[:, None]).astype(jnp.int32)

    ref = reference_forward(hidden, encoder_outputs, mask, w_attn, b_attn, v_w)

    # float32 path (tolerance covers the approximate EUP reciprocal).
    out_f32 = attention_forward(hidden, encoder_outputs, mask, w_attn, b_attn, v_w,
                                compute_dtype=jnp.float32)
    out_f32 = jax.block_until_ready(out_f32)
    assert out_f32.shape == (batch, src_len)
    assert jnp.allclose(out_f32, ref, atol=1e-3, rtol=1e-3), "f32 mismatch vs reference"
    assert jnp.allclose(jnp.sum(out_f32, axis=1), jnp.ones((batch,)), atol=5e-3)

    # bfloat16 inputs (halved HBM traffic, f32 accumulation) -- looser tolerance.
    out_bf16 = attention_forward(hidden, encoder_outputs, mask, w_attn, b_attn, v_w,
                                 compute_dtype=jnp.bfloat16)
    out_bf16 = jax.block_until_ready(out_bf16)
    assert jnp.allclose(out_bf16, ref, atol=2e-2), "bf16 mismatch vs reference"

    # Tiny-batch fallback path (TB == B, full-dim blocks, grid=(1,)).
    out_small = attention_forward(hidden[:2], encoder_outputs[:, :2, :], mask[:2],
                                  w_attn, b_attn, v_w, compute_dtype=jnp.float32)
    out_small = jax.block_until_ready(out_small)
    ref_small = reference_forward(hidden[:2], encoder_outputs[:, :2, :], mask[:2],
                                  w_attn, b_attn, v_w)
    assert jnp.allclose(out_small, ref_small, atol=1e-3, rtol=1e-3)

    print("KERNEL_OK")
</pallas_src>

<mosaic_0001>
module attributes {stable_mosaic.version = 11 : i64} {
  func.func @attention_kernel(%arg0: i32, %arg1: memref<12x256xf32, #tpu.memory_space<vmem>>, %arg2: memref<8x32xf32, #tpu.memory_space<vmem>>, %arg3: memref<32x32xf32, #tpu.memory_space<vmem>>, %arg4: memref<32x32xf32, #tpu.memory_space<vmem>>, %arg5: memref<32x1xf32, #tpu.memory_space<vmem>>, %arg6: memref<32x1xf32, #tpu.memory_space<vmem>>, %arg7: memref<8x12xi32, #tpu.memory_space<vmem>>, %arg8: memref<8x12xf32, #tpu.memory_space<vmem>>) attributes {dimension_semantics = [#tpu.dimension_semantics<parallel>], iteration_bounds = array<i64: 2>, scalar_prefetch = 0 : i64, scratch_operands = 0 : i64, tpu.core_type = #tpu.core_type<tc>, window_params = [{transform_indices = @transform_0, window_bounds = array<i64: 12, 256>}, {transform_indices = @transform_1, window_bounds = array<i64: 8, 32>}, {pipeline_mode = #tpu.pipeline_mode<synchronous>, transform_indices = @transform_2, window_bounds = array<i64: 32, 32>}, {pipeline_mode = #tpu.pipeline_mode<synchronous>, transform_indices = @transform_3, window_bounds = array<i64: 32, 32>}, {pipeline_mode = #tpu.pipeline_mode<synchronous>, transform_indices = @transform_4, window_bounds = array<i64: 32, 1>}, {pipeline_mode = #tpu.pipeline_mode<synchronous>, transform_indices = @transform_5, window_bounds = array<i64: 32, 1>}, {transform_indices = @transform_6, window_bounds = array<i64: 8, 12>}, {transform_indices = @transform_7, window_bounds = array<i64: 8, 12>}]} {
    %c0 = arith.constant 0 : index
    %c0_0 = arith.constant 0 : index
    %0 = vector.load %arg4[%c0, %c0_0] : memref<32x32xf32, #tpu.memory_space<vmem>>, vector<32x32xf32>
    %c0_1 = arith.constant 0 : index
    %c0_2 = arith.constant 0 : index
    %1 = vector.load %arg2[%c0_1, %c0_2] : memref<8x32xf32, #tpu.memory_space<vmem>>, vector<8x32xf32>
    %cst = arith.constant dense<0.000000e+00> : vector<32x8xf32>
    %2 = tpu.matmul %0, %1, %cst {dimension_numbers = #tpu.dot_dimension_numbers<[1], [1], [0], [0], [0, 0, 1, 0], [], []>} : vector<32x32xf32>, vector<8x32xf32>, vector<32x8xf32> -> vector<32x8xf32>
    %c0_3 = arith.constant 0 : index
    %c0_4 = arith.constant 0 : index
    %3 = vector.load %arg5[%c0_3, %c0_4] : memref<32x1xf32, #tpu.memory_space<vmem>>, vector<32x1xf32>
    %4 = vector.broadcast %3 : vector<32x1xf32> to vector<32x8xf32>
    %5 = arith.addf %2, %4 : vector<32x8xf32>
    %c0_5 = arith.constant 0 : index
    %c0_6 = arith.constant 0 : index
    %6 = vector.load %arg3[%c0_5, %c0_6] : memref<32x32xf32, #tpu.memory_space<vmem>>, vector<32x32xf32>
    %c0_7 = arith.constant 0 : index
    %c0_8 = arith.constant 0 : index
    %7 = vector.load %arg6[%c0_7, %c0_8] : memref<32x1xf32, #tpu.memory_space<vmem>>, vector<32x1xf32>
    %c0_9 = arith.constant 0 : index
    %c0_10 = arith.constant 0 : index
    %8 = vector.load %arg1[%c0_9, %c0_10] : memref<12x256xf32, #tpu.memory_space<vmem>>, vector<12x32xf32>
    %cst_11 = arith.constant dense<0.000000e+00> : vector<32x12xf32>
    %9 = tpu.matmul %6, %8, %cst_11 {dimension_numbers = #tpu.dot_dimension_numbers<[1], [1], [0], [0], [0, 0, 1, 0], [], []>} : vector<32x32xf32>, vector<12x32xf32>, vector<32x12xf32> -> vector<32x12xf32>
    %10 = vector.extract_strided_slice %5 {offsets = [0, 0], sizes = [32, 1], strides = [1, 1]} : vector<32x8xf32> to vector<32x1xf32>
    %11 = vector.broadcast %10 : vector<32x1xf32> to vector<32x12xf32>
    %12 = arith.addf %9, %11 : vector<32x12xf32>
    %13 = math.tanh %12 : vector<32x12xf32>
    %14 = vector.broadcast %7 : vector<32x1xf32> to vector<32x12xf32>
    %15 = arith.mulf %13, %14 : vector<32x12xf32>
    %cst_12 = arith.constant dense<0.000000e+00> : vector<12xf32>
    %16 = vector.multi_reduction <add>, %15, %cst_12 [0] : vector<32x12xf32> to vector<12xf32>
    %17 = vector.shape_cast %16 : vector<12xf32> to vector<1x12xf32>
    %c0_13 = arith.constant 0 : index
    %c0_14 = arith.constant 0 : index
    %18 = vector.load %arg7[%c0_13, %c0_14] : memref<8x12xi32, #tpu.memory_space<vmem>>, vector<1x12xi32>
    %c0_i32 = arith.constant 0 : i32
    %19 = vector.broadcast %c0_i32 : i32 to vector<1x12xi32>
    %20 = arith.cmpi eq, %18, %19 : vector<1x12xi32>
    %cst_15 = arith.constant -1.000000e+10 : f32
    %21 = vector.broadcast %cst_15 : f32 to vector<1x12xf32>
    %22 = arith.select %20, %21, %17 : vector<1x12xi1>, vector<1x12xf32>
    %cst_16 = arith.constant dense<0xFF800000> : vector<1xf32>
    %23 = vector.multi_reduction <maximumf>, %22, %cst_16 [1] : vector<1x12xf32> to vector<1xf32>
    %24 = vector.shape_cast %23 : vector<1xf32> to vector<1x1xf32>
    %25 = vector.broadcast %24 : vector<1x1xf32> to vector<1x12xf32>
    %26 = arith.subf %22, %25 : vector<1x12xf32>
    %27 = math.exp %26 : vector<1x12xf32>
    %cst_17 = arith.constant dense<0.000000e+00> : vector<1xf32>
    %28 = vector.multi_reduction <add>, %27, %cst_17 [1] : vector<1x12xf32> to vector<1xf32>
    %29 = vector.shape_cast %28 : vector<1xf32> to vector<1x1xf32>
    %30 = tpu.reciprocal %29 {approx = true} : vector<1x1xf32> -> vector<1x1xf32>
    %31 = vector.broadcast %30 : vector<1x1xf32> to vector<1x12xf32>
    %32 = arith.mulf %27, %31 : vector<1x12xf32>
    %c0_18 = arith.constant 0 : index
    %c0_19 = arith.constant 0 : index
    %33 = vector.load %arg8[%c0_18, %c0_19] : memref<8x12xf32, #tpu.memory_space<vmem>>, vector<1x12xf32>
    tpu.vector_store %arg8[%c0_18, %c0_19], %32 {strides = array<i32>} : memref<8x12xf32, #tpu.memory_space<vmem>>, vector<1x12xf32>,
    %c0_20 = arith.constant 0 : index
    %c32 = arith.constant 32 : index
    %34 = vector.load %arg1[%c0_20, %c32] : memref<12x256xf32, #tpu.memory_space<vmem>>, vector<12x32xf32>
    %cst_21 = arith.constant dense<0.000000e+00> : vector<32x12xf32>
    %35 = tpu.matmul %6, %34, %cst_21 {dimension_numbers = #tpu.dot_dimension_numbers<[1], [1], [0], [0], [0, 0, 1, 0], [], []>} : vector<32x32xf32>, vector<12x32xf32>, vector<32x12xf32> -> vector<32x12xf32>
    %36 = vector.extract_strided_slice %5 {offsets = [0, 1], sizes = [32, 1], strides = [1, 1]} : vector<32x8xf32> to vector<32x1xf32>
    %37 = vector.broadcast %36 : vector<32x1xf32> to vector<32x12xf32>
    %38 = arith.addf %35, %37 : vector<32x12xf32>
    %39 = math.tanh %38 : vector<32x12xf32>
    %40 = vector.broadcast %7 : vector<32x1xf32> to vector<32x12xf32>
    %41 = arith.mulf %39, %40 : vector<32x12xf32>
    %cst_22 = arith.constant dense<0.000000e+00> : vector<12xf32>
    %42 = vector.multi_reduction <add>, %41, %cst_22 [0] : vector<32x12xf32> to vector<12xf32>
    %43 = vector.shape_cast %42 : vector<12xf32> to vector<1x12xf32>
    %c1 = arith.constant 1 : index
    %c0_23 = arith.constant 0 : index
    %44 = vector.load %arg7[%c1, %c0_23] : memref<8x12xi32, #tpu.memory_space<vmem>>, vector<1x12xi32>
    %c0_i32_24 = arith.constant 0 : i32
    %45 = vector.broadcast %c0_i32_24 : i32 to vector<1x12xi32>
    %46 = arith.cmpi eq, %44, %45 : vector<1x12xi32>
    %cst_25 = arith.constant -1.000000e+10 : f32
    %47 = vector.broadcast %cst_25 : f32 to vector<1x12xf32>
    %48 = arith.select %46, %47, %43 : vector<1x12xi1>, vector<1x12xf32>
    %cst_26 = arith.constant dense<0xFF800000> : vector<1xf32>
    %49 = vector.multi_reduction <maximumf>, %48, %cst_26 [1] : vector<1x12xf32> to vector<1xf32>
    %50 = vector.shape_cast %49 : vector<1xf32> to vector<1x1xf32>
    %51 = vector.broadcast %50 : vector<1x1xf32> to vector<1x12xf32>
    %52 = arith.subf %48, %51 : vector<1x12xf32>
    %53 = math.exp %52 : vector<1x12xf32>
    %cst_27 = arith.constant dense<0.000000e+00> : vector<1xf32>
    %54 = vector.multi_reduction <add>, %53, %cst_27 [1] : vector<1x12xf32> to vector<1xf32>
    %55 = vector.shape_cast %54 : vector<1xf32> to vector<1x1xf32>
    %56 = tpu.reciprocal %55 {approx = true} : vector<1x1xf32> -> vector<1x1xf32>
    %57 = vector.broadcast %56 : vector<1x1xf32> to vector<1x12xf32>
    %58 = arith.mulf %53, %57 : vector<1x12xf32>
    %c1_28 = arith.constant 1 : index
    %c0_29 = arith.constant 0 : index
    %59 = vector.load %arg8[%c1_28, %c0_29] : memref<8x12xf32, #tpu.memory_space<vmem>>, vector<1x12xf32>
    tpu.vector_store %arg8[%c1_28, %c0_29], %58 {strides = array<i32>} : memref<8x12xf32, #tpu.memory_space<vmem>>, vector<1x12xf32>,
    %c0_30 = arith.constant 0 : index
    %c64 = arith.constant 64 : index
    %60 = vector.load %arg1[%c0_30, %c64] : memref<12x256xf32, #tpu.memory_space<vmem>>, vector<12x32xf32>
    %cst_31 = arith.constant dense<0.000000e+00> : vector<32x12xf32>
    %61 = tpu.matmul %6, %60, %cst_31 {dimension_numbers = #tpu.dot_dimension_numbers<[1], [1], [0], [0], [0, 0, 1, 0], [], []>} : vector<32x32xf32>, vector<12x32xf32>, vector<32x12xf32> -> vector<32x12xf32>
    %62 = vector.extract_strided_slice %5 {offsets = [0, 2], sizes = [32, 1], strides = [1, 1]} : vector<32x8xf32> to vector<32x1xf32>
    %63 = vector.broadcast %62 : vector<32x1xf32> to vector<32x12xf32>
    %64 = arith.addf %61, %63 : vector<32x12xf32>
    %65 = math.tanh %64 : vector<32x12xf32>
    %66 = vector.broadcast %7 : vector<32x1xf32> to vector<32x12xf32>
    %67 = arith.mulf %65, %66 : vector<32x12xf32>
    %cst_32 = arith.constant dense<0.000000e+00> : vector<12xf32>
    %68 = vector.multi_reduction <add>, %67, %cst_32 [0] : vector<32x12xf32> to vector<12xf32>
    %69 = vector.shape_cast %68 : vector<12xf32> to vector<1x12xf32>
    %c2 = arith.constant 2 : index
    %c0_33 = arith.constant 0 : index
    %70 = vector.load %arg7[%c2, %c0_33] : memref<8x12xi32, #tpu.memory_space<vmem>>, vector<1x12xi32>
    %c0_i32_34 = arith.constant 0 : i32
    %71 = vector.broadcast %c0_i32_34 : i32 to vector<1x12xi32>
    %72 = arith.cmpi eq, %70, %71 : vector<1x12xi32>
    %cst_35 = arith.constant -1.000000e+10 : f32
    %73 = vector.broadcast %cst_35 : f32 to vector<1x12xf32>
    %74 = arith.select %72, %73, %69 : vector<1x12xi1>, vector<1x12xf32>
    %cst_36 = arith.constant dense<0xFF800000> : vector<1xf32>
    %75 = vector.multi_reduction <maximumf>, %74, %cst_36 [1] : vector<1x12xf32> to vector<1xf32>
    %76 = vector.shape_cast %75 : vector<1xf32> to vector<1x1xf32>
    %77 = vector.broadcast %76 : vector<1x1xf32> to vector<1x12xf32>
    %78 = arith.subf %74, %77 : vector<1x12xf32>
    %79 = math.exp %78 : vector<1x12xf32>
    %cst_37 = arith.constant dense<0.000000e+00> : vector<1xf32>
    %80 = vector.multi_reduction <add>, %79, %cst_37 [1] : vector<1x12xf32> to vector<1xf32>
    %81 = vector.shape_cast %80 : vector<1xf32> to vector<1x1xf32>
    %82 = tpu.reciprocal %81 {approx = true} : vector<1x1xf32> -> vector<1x1xf32>
    %83 = vector.broadcast %82 : vector<1x1xf32> to vector<1x12xf32>
    %84 = arith.mulf %79, %83 : vector<1x12xf32>
    %c2_38 = arith.constant 2 : index
    %c0_39 = arith.constant 0 : index
    %85 = vector.load %arg8[%c2_38, %c0_39] : memref<8x12xf32, #tpu.memory_space<vmem>>, vector<1x12xf32>
    tpu.vector_store %arg8[%c2_38, %c0_39], %84 {strides = array<i32>} : memref<8x12xf32, #tpu.memory_space<vmem>>, vector<1x12xf32>,
    %c0_40 = arith.constant 0 : index
    %c96 = arith.constant 96 : index
    %86 = vector.load %arg1[%c0_40, %c96] : memref<12x256xf32, #tpu.memory_space<vmem>>, vector<12x32xf32>
    %cst_41 = arith.constant dense<0.000000e+00> : vector<32x12xf32>
    %87 = tpu.matmul %6, %86, %cst_41 {dimension_numbers = #tpu.dot_dimension_numbers<[1], [1], [0], [0], [0, 0, 1, 0], [], []>} : vector<32x32xf32>, vector<12x32xf32>, vector<32x12xf32> -> vector<32x12xf32>
    %88 = vector.extract_strided_slice %5 {offsets = [0, 3], sizes = [32, 1], strides = [1, 1]} : vector<32x8xf32> to vector<32x1xf32>
    %89 = vector.broadcast %88 : vector<32x1xf32> to vector<32x12xf32>
    %90 = arith.addf %87, %89 : vector<32x12xf32>
    %91 = math.tanh %90 : vector<32x12xf32>
    %92 = vector.broadcast %7 : vector<32x1xf32> to vector<32x12xf32>
    %93 = arith.mulf %91, %92 : vector<32x12xf32>
    %cst_42 = arith.constant dense<0.000000e+00> : vector<12xf32>
    %94 = vector.multi_reduction <add>, %93, %cst_42 [0] : vector<32x12xf32> to vector<12xf32>
    %95 = vector.shape_cast %94 : vector<12xf32> to vector<1x12xf32>
    %c3 = arith.constant 3 : index
    %c0_43 = arith.constant 0 : index
    %96 = vector.load %arg7[%c3, %c0_43] : memref<8x12xi32, #tpu.memory_space<vmem>>, vector<1x12xi32>
    %c0_i32_44 = arith.constant 0 : i32
    %97 = vector.broadcast %c0_i32_44 : i32 to vector<1x12xi32>
    %98 = arith.cmpi eq, %96, %97 : vector<1x12xi32>
    %cst_45 = arith.constant -1.000000e+10 : f32
    %99 = vector.broadcast %cst_45 : f32 to vector<1x12xf32>
    %100 = arith.select %98, %99, %95 : vector<1x12xi1>, vector<1x12xf32>
    %cst_46 = arith.constant dense<0xFF800000> : vector<1xf32>
    %101 = vector.multi_reduction <maximumf>, %100, %cst_46 [1] : vector<1x12xf32> to vector<1xf32>
    %102 = vector.shape_cast %101 : vector<1xf32> to vector<1x1xf32>
    %103 = vector.broadcast %102 : vector<1x1xf32> to vector<1x12xf32>
    %104 = arith.subf %100, %103 : vector<1x12xf32>
    %105 = math.exp %104 : vector<1x12xf32>
    %cst_47 = arith.constant dense<0.000000e+00> : vector<1xf32>
    %106 = vector.multi_reduction <add>, %105, %cst_47 [1] : vector<1x12xf32> to vector<1xf32>
    %107 = vector.shape_cast %106 : vector<1xf32> to vector<1x1xf32>
    %108 = tpu.reciprocal %107 {approx = true} : vector<1x1xf32> -> vector<1x1xf32>
    %109 = vector.broadcast %108 : vector<1x1xf32> to vector<1x12xf32>
    %110 = arith.mulf %105, %109 : vector<1x12xf32>
    %c3_48 = arith.constant 3 : index
    %c0_49 = arith.constant 0 : index
    %111 = vector.load %arg8[%c3_48, %c0_49] : memref<8x12xf32, #tpu.memory_space<vmem>>, vector<1x12xf32>
    tpu.vector_store %arg8[%c3_48, %c0_49], %110 {strides = array<i32>} : memref<8x12xf32, #tpu.memory_space<vmem>>, vector<1x12xf32>,
    %c0_50 = arith.constant 0 : index
    %c128 = arith.constant 128 : index
    %112 = vector.load %arg1[%c0_50, %c128] : memref<12x256xf32, #tpu.memory_space<vmem>>, vector<12x32xf32>
    %cst_51 = arith.constant dense<0.000000e+00> : vector<32x12xf32>
    %113 = tpu.matmul %6, %112, %cst_51 {dimension_numbers = #tpu.dot_dimension_numbers<[1], [1], [0], [0], [0, 0, 1, 0], [], []>} : vector<32x32xf32>, vector<12x32xf32>, vector<32x12xf32> -> vector<32x12xf32>
    %114 = vector.extract_strided_slice %5 {offsets = [0, 4], sizes = [32, 1], strides = [1, 1]} : vector<32x8xf32> to vector<32x1xf32>
    %115 = vector.broadcast %114 : vector<32x1xf32> to vector<32x12xf32>
    %116 = arith.addf %113, %115 : vector<32x12xf32>
    %117 = math.tanh %116 : vector<32x12xf32>
    %118 = vector.broadcast %7 : vector<32x1xf32> to vector<32x12xf32>
    %119 = arith.mulf %117, %118 : vector<32x12xf32>
    %cst_52 = arith.constant dense<0.000000e+00> : vector<12xf32>
    %120 = vector.multi_reduction <add>, %119, %cst_52 [0] : vector<32x12xf32> to vector<12xf32>
    %121 = vector.shape_cast %120 : vector<12xf32> to vector<1x12xf32>
    %c4 = arith.constant 4 : index
    %c0_53 = arith.constant 0 : index
    %122 = vector.load %arg7[%c4, %c0_53] : memref<8x12xi32, #tpu.memory_space<vmem>>, vector<1x12xi32>
    %c0_i32_54 = arith.constant 0 : i32
    %123 = vector.broadcast %c0_i32_54 : i32 to vector<1x12xi32>
    %124 = arith.cmpi eq, %122, %123 : vector<1x12xi32>
    %cst_55 = arith.constant -1.000000e+10 : f32
    %125 = vector.broadcast %cst_55 : f32 to vector<1x12xf32>
    %126 = arith.select %124, %125, %121 : vector<1x12xi1>, vector<1x12xf32>
    %cst_56 = arith.constant dense<0xFF800000> : vector<1xf32>
    %127 = vector.multi_reduction <maximumf>, %126, %cst_56 [1] : vector<1x12xf32> to vector<1xf32>
    %128 = vector.shape_cast %127 : vector<1xf32> to vector<1x1xf32>
    %129 = vector.broadcast %128 : vector<1x1xf32> to vector<1x12xf32>
    %130 = arith.subf %126, %129 : vector<1x12xf32>
    %131 = math.exp %130 : vector<1x12xf32>
    %cst_57 = arith.constant dense<0.000000e+00> : vector<1xf32>
    %132 = vector.multi_reduction <add>, %131, %cst_57 [1] : vector<1x12xf32> to vector<1xf32>
    %133 = vector.shape_cast %132 : vector<1xf32> to vector<1x1xf32>
    %134 = tpu.reciprocal %133 {approx = true} : vector<1x1xf32> -> vector<1x1xf32>
    %135 = vector.broadcast %134 : vector<1x1xf32> to vector<1x12xf32>
    %136 = arith.mulf %131, %135 : vector<1x12xf32>
    %c4_58 = arith.constant 4 : index
    %c0_59 = arith.constant 0 : index
    %137 = vector.load %arg8[%c4_58, %c0_59] : memref<8x12xf32, #tpu.memory_space<vmem>>, vector<1x12xf32>
    tpu.vector_store %arg8[%c4_58, %c0_59], %136 {strides = array<i32>} : memref<8x12xf32, #tpu.memory_space<vmem>>, vector<1x12xf32>,
    %c0_60 = arith.constant 0 : index
    %c160 = arith.constant 160 : index
    %138 = vector.load %arg1[%c0_60, %c160] : memref<12x256xf32, #tpu.memory_space<vmem>>, vector<12x32xf32>
    %cst_61 = arith.constant dense<0.000000e+00> : vector<32x12xf32>
    %139 = tpu.matmul %6, %138, %cst_61 {dimension_numbers = #tpu.dot_dimension_numbers<[1], [1], [0], [0], [0, 0, 1, 0], [], []>} : vector<32x32xf32>, vector<12x32xf32>, vector<32x12xf32> -> vector<32x12xf32>
    %140 = vector.extract_strided_slice %5 {offsets = [0, 5], sizes = [32, 1], strides = [1, 1]} : vector<32x8xf32> to vector<32x1xf32>
    %141 = vector.broadcast %140 : vector<32x1xf32> to vector<32x12xf32>
    %142 = arith.addf %139, %141 : vector<32x12xf32>
    %143 = math.tanh %142 : vector<32x12xf32>
    %144 = vector.broadcast %7 : vector<32x1xf32> to vector<32x12xf32>
    %145 = arith.mulf %143, %144 : vector<32x12xf32>
    %cst_62 = arith.constant dense<0.000000e+00> : vector<12xf32>
    %146 = vector.multi_reduction <add>, %145, %cst_62 [0] : vector<32x12xf32> to vector<12xf32>
    %147 = vector.shape_cast %146 : vector<12xf32> to vector<1x12xf32>
    %c5 = arith.constant 5 : index
    %c0_63 = arith.constant 0 : index
    %148 = vector.load %arg7[%c5, %c0_63] : memref<8x12xi32, #tpu.memory_space<vmem>>, vector<1x12xi32>
    %c0_i32_64 = arith.constant 0 : i32
    %149 = vector.broadcast %c0_i32_64 : i32 to vector<1x12xi32>
    %150 = arith.cmpi eq, %148, %149 : vector<1x12xi32>
    %cst_65 = arith.constant -1.000000e+10 : f32
    %151 = vector.broadcast %cst_65 : f32 to vector<1x12xf32>
    %152 = arith.select %150, %151, %147 : vector<1x12xi1>, vector<1x12xf32>
    %cst_66 = arith.constant dense<0xFF800000> : vector<1xf32>
    %153 = vector.multi_reduction <maximumf>, %152, %cst_66 [1] : vector<1x12xf32> to vector<1xf32>
    %154 = vector.shape_cast %153 : vector<1xf32> to vector<1x1xf32>
    %155 = vector.broadcast %154 : vector<1x1xf32> to vector<1x12xf32>
    %156 = arith.subf %152, %155 : vector<1x12xf32>
    %157 = math.exp %156 : vector<1x12xf32>
    %cst_67 = arith.constant dense<0.000000e+00> : vector<1xf32>
    %158 = vector.multi_reduction <add>, %157, %cst_67 [1] : vector<1x12xf32> to vector<1xf32>
    %159 = vector.shape_cast %158 : vector<1xf32> to vector<1x1xf32>
    %160 = tpu.reciprocal %159 {approx = true} : vector<1x1xf32> -> vector<1x1xf32>
    %161 = vector.broadcast %160 : vector<1x1xf32> to vector<1x12xf32>
    %162 = arith.mulf %157, %161 : vector<1x12xf32>
    %c5_68 = arith.constant 5 : index
    %c0_69 = arith.constant 0 : index
    %163 = vector.load %arg8[%c5_68, %c0_69] : memref<8x12xf32, #tpu.memory_space<vmem>>, vector<1x12xf32>
    tpu.vector_store %arg8[%c5_68, %c0_69], %162 {strides = array<i32>} : memref<8x12xf32, #tpu.memory_space<vmem>>, vector<1x12xf32>,
    %c0_70 = arith.constant 0 : index
    %c192 = arith.constant 192 : index
    %164 = vector.load %arg1[%c0_70, %c192] : memref<12x256xf32, #tpu.memory_space<vmem>>, vector<12x32xf32>
    %cst_71 = arith.constant dense<0.000000e+00> : vector<32x12xf32>
    %165 = tpu.matmul %6, %164, %cst_71 {dimension_numbers = #tpu.dot_dimension_numbers<[1], [1], [0], [0], [0, 0, 1, 0], [], []>} : vector<32x32xf32>, vector<12x32xf32>, vector<32x12xf32> -> vector<32x12xf32>
    %166 = vector.extract_strided_slice %5 {offsets = [0, 6], sizes = [32, 1], strides = [1, 1]} : vector<32x8xf32> to vector<32x1xf32>
    %167 = vector.broadcast %166 : vector<32x1xf32> to vector<32x12xf32>
    %168 = arith.addf %165, %167 : vector<32x12xf32>
    %169 = math.tanh %168 : vector<32x12xf32>
    %170 = vector.broadcast %7 : vector<32x1xf32> to vector<32x12xf32>
    %171 = arith.mulf %169, %170 : vector<32x12xf32>
    %cst_72 = arith.constant dense<0.000000e+00> : vector<12xf32>
    %172 = vector.multi_reduction <add>, %171, %cst_72 [0] : vector<32x12xf32> to vector<12xf32>
    %173 = vector.shape_cast %172 : vector<12xf32> to vector<1x12xf32>
    %c6 = arith.constant 6 : index
    %c0_73 = arith.constant 0 : index
    %174 = vector.load %arg7[%c6, %c0_73] : memref<8x12xi32, #tpu.memory_space<vmem>>, vector<1x12xi32>
    %c0_i32_74 = arith.constant 0 : i32
    %175 = vector.broadcast %c0_i32_74 : i32 to vector<1x12xi32>
    %176 = arith.cmpi eq, %174, %175 : vector<1x12xi32>
    %cst_75 = arith.constant -1.000000e+10 : f32
    %177 = vector.broadcast %cst_75 : f32 to vector<1x12xf32>
    %178 = arith.select %176, %177, %173 : vector<1x12xi1>, vector<1x12xf32>
    %cst_76 = arith.constant dense<0xFF800000> : vector<1xf32>
    %179 = vector.multi_reduction <maximumf>, %178, %cst_76 [1] : vector<1x12xf32> to vector<1xf32>
    %180 = vector.shape_cast %179 : vector<1xf32> to vector<1x1xf32>
    %181 = vector.broadcast %180 : vector<1x1xf32> to vector<1x12xf32>
    %182 = arith.subf %178, %181 : vector<1x12xf32>
    %183 = math.exp %182 : vector<1x12xf32>
    %cst_77 = arith.constant dense<0.000000e+00> : vector<1xf32>
    %184 = vector.multi_reduction <add>, %183, %cst_77 [1] : vector<1x12xf32> to vector<1xf32>
    %185 = vector.shape_cast %184 : vector<1xf32> to vector<1x1xf32>
    %186 = tpu.reciprocal %185 {approx = true} : vector<1x1xf32> -> vector<1x1xf32>
    %187 = vector.broadcast %186 : vector<1x1xf32> to vector<1x12xf32>
    %188 = arith.mulf %183, %187 : vector<1x12xf32>
    %c6_78 = arith.constant 6 : index
    %c0_79 = arith.constant 0 : index
    %189 = vector.load %arg8[%c6_78, %c0_79] : memref<8x12xf32, #tpu.memory_space<vmem>>, vector<1x12xf32>
    tpu.vector_store %arg8[%c6_78, %c0_79], %188 {strides = array<i32>} : memref<8x12xf32, #tpu.memory_space<vmem>>, vector<1x12xf32>,
    %c0_80 = arith.constant 0 : index
    %c224 = arith.constant 224 : index
    %190 = vector.load %arg1[%c0_80, %c224] : memref<12x256xf32, #tpu.memory_space<vmem>>, vector<12x32xf32>
    %cst_81 = arith.constant dense<0.000000e+00> : vector<32x12xf32>
    %191 = tpu.matmul %6, %190, %cst_81 {dimension_numbers = #tpu.dot_dimension_numbers<[1], [1], [0], [0], [0, 0, 1, 0], [], []>} : vector<32x32xf32>, vector<12x32xf32>, vector<32x12xf32> -> vector<32x12xf32>
    %192 = vector.extract_strided_slice %5 {offsets = [0, 7], sizes = [32, 1], strides = [1, 1]} : vector<32x8xf32> to vector<32x1xf32>
    %193 = vector.broadcast %192 : vector<32x1xf32> to vector<32x12xf32>
    %194 = arith.addf %191, %193 : vector<32x12xf32>
    %195 = math.tanh %194 : vector<32x12xf32>
    %196 = vector.broadcast %7 : vector<32x1xf32> to vector<32x12xf32>
    %197 = arith.mulf %195, %196 : vector<32x12xf32>
    %cst_82 = arith.constant dense<0.000000e+00> : vector<12xf32>
    %198 = vector.multi_reduction <add>, %197, %cst_82 [0] : vector<32x12xf32> to vector<12xf32>
    %199 = vector.shape_cast %198 : vector<12xf32> to vector<1x12xf32>
    %c7 = arith.constant 7 : index
    %c0_83 = arith.constant 0 : index
    %200 = vector.load %arg7[%c7, %c0_83] : memref<8x12xi32, #tpu.memory_space<vmem>>, vector<1x12xi32>
    %c0_i32_84 = arith.constant 0 : i32
    %201 = vector.broadcast %c0_i32_84 : i32 to vector<1x12xi32>
    %202 = arith.cmpi eq, %200, %201 : vector<1x12xi32>
    %cst_85 = arith.constant -1.000000e+10 : f32
    %203 = vector.broadcast %cst_85 : f32 to vector<1x12xf32>
    %204 = arith.select %202, %203, %199 : vector<1x12xi1>, vector<1x12xf32>
    %cst_86 = arith.constant dense<0xFF800000> : vector<1xf32>
    %205 = vector.multi_reduction <maximumf>, %204, %cst_86 [1] : vector<1x12xf32> to vector<1xf32>
    %206 = vector.shape_cast %205 : vector<1xf32> to vector<1x1xf32>
    %207 = vector.broadcast %206 : vector<1x1xf32> to vector<1x12xf32>
    %208 = arith.subf %204, %207 : vector<1x12xf32>
    %209 = math.exp %208 : vector<1x12xf32>
    %cst_87 = arith.constant dense<0.000000e+00> : vector<1xf32>
    %210 = vector.multi_reduction <add>, %209, %cst_87 [1] : vector<1x12xf32> to vector<1xf32>
    %211 = vector.shape_cast %210 : vector<1xf32> to vector<1x1xf32>
    %212 = tpu.reciprocal %211 {approx = true} : vector<1x1xf32> -> vector<1x1xf32>
    %213 = vector.broadcast %212 : vector<1x1xf32> to vector<1x12xf32>
    %214 = arith.mulf %209, %213 : vector<1x12xf32>
    %c7_88 = arith.constant 7 : index
    %c0_89 = arith.constant 0 : index
    %215 = vector.load %arg8[%c7_88, %c0_89] : memref<8x12xf32, #tpu.memory_space<vmem>>, vector<1x12xf32>
    tpu.vector_store %arg8[%c7_88, %c0_89], %214 {strides = array<i32>} : memref<8x12xf32, #tpu.memory_space<vmem>>, vector<1x12xf32>,
    return
  }
  func.func @transform_0(%arg0: i32) -> (i32, i32) {
    %c0_i32 = arith.constant 0 : i32
    %c0_i32_0 = arith.constant 0 : i32
    return %c0_i32, %arg0 : i32, i32
  }
  func.func @transform_1(%arg0: i32) -> (i32, i32) {
    %c0_i32 = arith.constant 0 : i32
    %c0_i32_0 = arith.constant 0 : i32
    return %arg0, %c0_i32 : i32, i32
  }
  func.func @transform_2(%arg0: i32) -> (i32, i32) {
    %c0_i32 = arith.constant 0 : i32
    %c0_i32_0 = arith.constant 0 : i32
    %c0_i32_1 = arith.constant 0 : i32
    return %c0_i32, %c0_i32_0 : i32, i32
  }
  func.func @transform_3(%arg0: i32) -> (i32, i32) {
    %c0_i32 = arith.constant 0 : i32
    %c0_i32_0 = arith.constant 0 : i32
    %c0_i32_1 = arith.constant 0 : i32
    return %c0_i32, %c0_i32_0 : i32, i32
  }
  func.func @transform_4(%arg0: i32) -> (i32, i32) {
    %c0_i32 = arith.constant 0 : i32
    %c0_i32_0 = arith.constant 0 : i32
    %c0_i32_1 = arith.constant 0 : i32
    return %c0_i32, %c0_i32_0 : i32, i32
  }
  func.func @transform_5(%arg0: i32) -> (i32, i32) {
    %c0_i32 = arith.constant 0 : i32
    %c0_i32_0 = arith.constant 0 : i32
    %c0_i32_1 = arith.constant 0 : i32
    return %c0_i32, %c0_i32_0 : i32, i32
  }
  func.func @transform_6(%arg0: i32) -> (i32, i32) {
    %c0_i32 = arith.constant 0 : i32
    %c0_i32_0 = arith.constant 0 : i32
    return %arg0, %c0_i32 : i32, i32
  }
  func.func @transform_7(%arg0: i32) -> (i32, i32) {
    %c0_i32 = arith.constant 0 : i32
    %c0_i32_0 = arith.constant 0 : i32
    return %arg0, %c0_i32 : i32, i32
  }
}

</mosaic_0001>

<llo_original>
// kernel: tpu_custom_call.1
$region0: #{tpu_custom_call.1}
  #allocation0 [shape = 'u32[]', space=smem, size = 0x4, offset = 0x4, fixed_abs, tag = 'smem constant byte address 0x4 - core index']
  #allocation1 [shape = 'u32[72,128]{1,0:T(1,128)}', space=vmem, size = 0x9000, scoped, tag = 'internal scratch']
  %s0 = inlined_call_operand.vmem [shape: f32[12,512], index: 0, kind: input, shape index: {}]
  %s1 = inlined_call_operand.hbm [shape: f32[16,32], index: 1, kind: input, shape index: {}]
  %s2 = inlined_call_operand.hbm [shape: f32[32,32], index: 2, kind: input, shape index: {}]
  %s3 = inlined_call_operand.hbm [shape: f32[32,32], index: 3, kind: input, shape index: {}]
  %s4 = inlined_call_operand.vmem [shape: f32[32,1], index: 4, kind: input, shape index: {}]
  %s5 = inlined_call_operand.vmem [shape: f32[32,1], index: 5, kind: input, shape index: {}]
  %s6 = inlined_call_operand.hbm [shape: s32[16,12], index: 6, kind: input, shape index: {}]
  %s7 = inlined_call_operand.hbm [shape: f32[16,12], index: 7, kind: output, shape index: {}]
  %s8 = sld [smem:[#allocation0]]
  $region100: #{tpu_custom_call.1} parent=0
    _
  %s10 = ssub.s32 1, %s8
  %s11 = scalar_select 0, %s10, %s8
  $region1: #{tpu_custom_call.1} parent=0
    #allocation2 [shape = 'u8[32768]{0}', space=vmem, size = 0x8000, scoped, tag = 'input window, operand 0']
    #allocation3 [shape = 'u8[8192]{0}', space=vmem, size = 0x2000, scoped, tag = 'input window, operand 1']
    #allocation4 [shape = 's32[2]{0}', space=sflag, size = 0x8, scoped, tag = 'scoped memory for tpu_custom_call.1']
    #allocation5 [shape = 's32[2]{0}', space=sflag, size = 0x8, scoped, tag = 'scoped memory for tpu_custom_call.1']
    #allocation6 [shape = 'u8[16384]{0}', space=vmem, size = 0x4000, scoped, tag = 'input window, operand 2, single buffered']
    #allocation7 [shape = 's32[1]{0}', space=sflag, size = 0x4, scoped, tag = 'scoped memory for tpu_custom_call.1']
    #allocation8 [shape = 'u8[16384]{0}', space=vmem, size = 0x4000, scoped, tag = 'input window, operand 3, single buffered']
    #allocation9 [shape = 'u8[8192]{0}', space=vmem, size = 0x2000, scoped, tag = 'input window, operand 6']
    #allocation10 [shape = 's32[2]{0}', space=sflag, size = 0x8, scoped, tag = 'scoped memory for tpu_custom_call.1']
    #allocation11 [shape = 'u8[8192]{0}', space=vmem, size = 0x2000, scoped, tag = 'output window, operand 0']
    %12 = vsyncpa [#allocation4], 0
    %s13 = scalar_lea.sflag [#allocation4], 1
    %14 = vsyncpa %s13, 0
    %15 = vsyncpa [#allocation7], 0
    %16 = vsyncpa [#allocation10], 0
    %s17 = scalar_lea.sflag [#allocation10], 1
    %18 = vsyncpa %s17, 0
    %19 = vsyncpa [#allocation5], 0
    %s20 = scalar_lea.sflag [#allocation5], 1
    %21 = vsyncpa %s20, 0
    loop: start=0, step=1, limit=4
    $region2: #{tpu_custom_call.1} parent=1 // loop_pre_header
      _
    $region3: #{tpu_custom_call.1} parent=1 // loop_header
      %s23 = sphi 0, %s27
      %p24 = scmp.ge.s32.totalorder %s23, 4
      %s33 = sphi 0, %s35
      %s36 = sphi 0, %s33
      %s37 = sphi 0, %s36
      %s53 = sphi 0, %s37
      %s59 = sphi 0, %s61
      %s62 = sphi 0, %s59
      %s63 = sphi 0, %s62
      %s79 = sphi 0, %s63
      %s83 = sphi 0, %s83
      %s85 = sphi 0, %s83
      %s86 = sphi 0, %s85
      %s100 = sphi 0, %s86
      %s104 = sphi 0, %s104
      %s106 = sphi 0, %s104
      %s107 = sphi 0, %s106
      %s121 = sphi 0, %s107
      %s125 = sphi 0, %s125
      %s127 = sphi 0, %s125
      %s128 = sphi 0, %s127
      %s142 = sphi 0, %s128
      %s146 = sphi 0, %s146
      %s148 = sphi 0, %s146
      %s149 = sphi 0, %s148
      %s163 = sphi 0, %s149
      %s169 = sphi 0, %s171
      %s172 = sphi 0, %s169
      %s173 = sphi 0, %s172
      %s189 = sphi 0, %s173
      %s195 = sphi 0, %s197
      %s198 = sphi 0, %s195
      %s199 = sphi 0, %s198
      %s215 = sphi 0, %s199
    $region4: #{tpu_custom_call.1} parent=1 // loop_header_branch
      %26 = sbr.rel (%p24) target = $region8
    $region5: #{tpu_custom_call.1} parent=1 // loop_body
      %s28 = ssub.s32 %s23, 1
      %s29 = ssub.s32 %s23, 2
      %s30 = sadd.s32 %s23, 1
      %s31 = ssub.s32 %s23, %s30
      %p32 = scmp.eq.s32.totalorder %s31, 0
      %s34 = sadd.s32 %s33, 1
      %s35 = scalar_select %p32, %s33, %s34
      %p38 = pneg %p32
      %p39 = scmp.eq.s32.totalorder %s23, 1
      %p40 = por %p38, %p39
      %p41 = scmp.ne.s32.totalorder %s33, %s36
      %p42 = scmp.eq.s32.totalorder %s23, 0
      %p43 = por %p41, %p42
      %p44 = scmp.ne.s32.totalorder %s33, %s36
      %p45 = scmp.eq.s32.totalorder %s28, 1
      %p46 = por %p44, %p45
      %p47 = scmp.ne.s32.totalorder %s36, %s37
      %p48 = scmp.eq.s32.totalorder %s28, 0
      %p49 = por %p47, %p48
      %p50 = scmp.ne.s32.totalorder %s36, %s37
      %p51 = scmp.eq.s32.totalorder %s29, 1
      %p52 = por %p50, %p51
      %p54 = scmp.ne.s32.totalorder %s37, %s53
      %p55 = scmp.eq.s32.totalorder %s29, 0
      %p56 = por %p54, %p55
      %s57 = ssub.s32 %s23, %s30
      %p58 = scmp.eq.s32.totalorder %s57, 0
      %s60 = sadd.s32 %s59, 1
      %s61 = scalar_select %p58, %s59, %s60
      %p64 = pneg %p58
      %p65 = scmp.eq.s32.totalorder %s23, 1
      %p66 = por %p64, %p65
      %p67 = scmp.ne.s32.totalorder %s59, %s62
      %p68 = scmp.eq.s32.totalorder %s23, 0
      %p69 = por %p67, %p68
      %p70 = scmp.ne.s32.totalorder %s59, %s62
      %p71 = scmp.eq.s32.totalorder %s28, 1
      %p72 = por %p70, %p71
      %p73 = scmp.ne.s32.totalorder %s62, %s63
      %p74 = scmp.eq.s32.totalorder %s28, 0
      %p75 = por %p73, %p74
      %p76 = scmp.ne.s32.totalorder %s62, %s63
      %p77 = scmp.eq.s32.totalorder %s29, 1
      %p78 = por %p76, %p77
      %p80 = scmp.ne.s32.totalorder %s63, %s79
      %p81 = scmp.eq.s32.totalorder %s29, 0
      %p82 = por %p80, %p81
      %s84 = sadd.s32 %s83, 1
      %p87 = scmp.eq.s32.totalorder %s23, 1
      %p88 = scmp.ne.s32.totalorder %s83, %s85
      %p89 = scmp.eq.s32.totalorder %s23, 0
      %p90 = por %p88, %p89
      %p91 = scmp.ne.s32.totalorder %s83, %s85
      %p92 = scmp.eq.s32.totalorder %s28, 1
      %p93 = por %p91, %p92
      %p94 = scmp.ne.s32.totalorder %s85, %s86
      %p95 = scmp.eq.s32.totalorder %s28, 0
      %p96 = por %p94, %p95
      %p97 = scmp.ne.s32.totalorder %s85, %s86
      %p98 = scmp.eq.s32.totalorder %s29, 1
      %p99 = por %p97, %p98
      %p101 = scmp.ne.s32.totalorder %s86, %s100
      %p102 = scmp.eq.s32.totalorder %s29, 0
      %p103 = por %p101, %p102
      %s105 = sadd.s32 %s104, 1
      %p108 = scmp.eq.s32.totalorder %s23, 1
      %p109 = scmp.ne.s32.totalorder %s104, %s106
      %p110 = scmp.eq.s32.totalorder %s23, 0
      %p111 = por %p109, %p110
      %p112 = scmp.ne.s32.totalorder %s104, %s106
      %p113 = scmp.eq.s32.totalorder %s28, 1
      %p114 = por %p112, %p113
      %p115 = scmp.ne.s32.totalorder %s106, %s107
      %p116 = scmp.eq.s32.totalorder %s28, 0
      %p117 = por %p115, %p116
      %p118 = scmp.ne.s32.totalorder %s106, %s107
      %p119 = scmp.eq.s32.totalorder %s29, 1
      %p120 = por %p118, %p119
      %p122 = scmp.ne.s32.totalorder %s107, %s121
      %p123 = scmp.eq.s32.totalorder %s29, 0
      %p124 = por %p122, %p123
      %s126 = sadd.s32 %s125, 1
      %p129 = scmp.eq.s32.totalorder %s23, 1
      %p130 = scmp.ne.s32.totalorder %s125, %s127
      %p131 = scmp.eq.s32.totalorder %s23, 0
      %p132 = por %p130, %p131
      %p133 = scmp.ne.s32.totalorder %s125, %s127
      %p134 = scmp.eq.s32.totalorder %s28, 1
      %p135 = por %p133, %p134
      %p136 = scmp.ne.s32.totalorder %s127, %s128
      %p137 = scmp.eq.s32.totalorder %s28, 0
      %p138 = por %p136, %p137
      %p139 = scmp.ne.s32.totalorder %s127, %s128
      %p140 = scmp.eq.s32.totalorder %s29, 1
      %p141 = por %p139, %p140
      %p143 = scmp.ne.s32.totalorder %s128, %s142
      %p144 = scmp.eq.s32.totalorder %s29, 0
      %p145 = por %p143, %p144
      %s147 = sadd.s32 %s146, 1
      %p150 = scmp.eq.s32.totalorder %s23, 1
      %p151 = scmp.ne.s32.totalorder %s146, %s148
      %p152 = scmp.eq.s32.totalorder %s23, 0
      %p153 = por %p151, %p152
      %p154 = scmp.ne.s32.totalorder %s146, %s148
      %p155 = scmp.eq.s32.totalorder %s28, 1
      %p156 = por %p154, %p155
      %p157 = scmp.ne.s32.totalorder %s148, %s149
      %p158 = scmp.eq.s32.totalorder %s28, 0
      %p159 = por %p157, %p158
      %p160 = scmp.ne.s32.totalorder %s148, %s149
      %p161 = scmp.eq.s32.totalorder %s29, 1
      %p162 = por %p160, %p161
      %p164 = scmp.ne.s32.totalorder %s149, %s163
      %p165 = scmp.eq.s32.totalorder %s29, 0
      %p166 = por %p164, %p165
      %s167 = ssub.s32 %s23, %s30
      %p168 = scmp.eq.s32.totalorder %s167, 0
      %s170 = sadd.s32 %s169, 1
      %s171 = scalar_select %p168, %s169, %s170
      %p174 = pneg %p168
      %p175 = scmp.eq.s32.totalorder %s23, 1
      %p176 = por %p174, %p175
      %p177 = scmp.ne.s32.totalorder %s169, %s172
      %p178 = scmp.eq.s32.totalorder %s23, 0
      %p179 = por %p177, %p178
      %p180 = scmp.ne.s32.totalorder %s169, %s172
      %p181 = scmp.eq.s32.totalorder %s28, 1
      %p182 = por %p180, %p181
      %p183 = scmp.ne.s32.totalorder %s172, %s173
      %p184 = scmp.eq.s32.totalorder %s28, 0
      %p185 = por %p183, %p184
      %p186 = scmp.ne.s32.totalorder %s172, %s173
      %p187 = scmp.eq.s32.totalorder %s29, 1
      %p188 = por %p186, %p187
      %p190 = scmp.ne.s32.totalorder %s173, %s189
      %p191 = scmp.eq.s32.totalorder %s29, 0
      %p192 = por %p190, %p191
      %s193 = ssub.s32 %s23, %s30
      %p194 = scmp.eq.s32.totalorder %s193, 0
      %s196 = sadd.s32 %s195, 1
      %s197 = scalar_select %p194, %s195, %s196
      %p200 = pneg %p194
      %p201 = scmp.eq.s32.totalorder %s23, 1
      %p202 = por %p200, %p201
      %p203 = scmp.ne.s32.totalorder %s195, %s198
      %p204 = scmp.eq.s32.totalorder %s23, 0
      %p205 = por %p203, %p204
      %p206 = scmp.ne.s32.totalorder %s195, %s198
      %p207 = scmp.eq.s32.totalorder %s28, 1
      %p208 = por %p206, %p207
      %p209 = scmp.ne.s32.totalorder %s198, %s199
      %p210 = scmp.eq.s32.totalorder %s28, 0
      %p211 = por %p209, %p210
      %p212 = scmp.ne.s32.totalorder %s198, %s199
      %p213 = scmp.eq.s32.totalorder %s29, 1
      %p214 = por %p212, %p213
      %p216 = scmp.ne.s32.totalorder %s199, %s215
      %p217 = scmp.eq.s32.totalorder %s29, 0
      %p218 = por %p216, %p217
      %p219 = scmp.le.s32.totalorder 1, %s23
      %p220 = scmp.lt.s32.totalorder %s23, 3
      %p221 = pnand %p219, %p220
      %p222 = pneg %p221
      // Predicated region
      $region9: #{tpu_custom_call.1} parent=5 // pred_check
        _
      $region10: #{tpu_custom_call.1} parent=5 // pred_check_branch
        %224 = sbr.rel (%p221) target = $region12
      $region11: #{tpu_custom_call.1} parent=5 // pred_region
        %s225 = ssub.s32 %s23, 1
        // Predicated region
        $region13: #{tpu_custom_call.1} parent=11 // pred_check
          %p226 = pneg %p96
        $region14: #{tpu_custom_call.1} parent=11 // pred_check_branch
          %228 = sbr.rel (%p226) target = $region16
        $region15: #{tpu_custom_call.1} parent=11 // pred_region
          %230 = vsyncadd [#allocation7], 0
          %s231 = sshll.u32 %s2, 4
          %s232 = int_to_ptr.hbm [resolvable:$true] %s231
          %s233 = sshll.u32 [#allocation6], 4
          %s234 = int_to_ptr.vmem [resolvable:$true] %s233
          %239 = dma.hbm_to_vmem [thread:$0]  %s232, 512, %s234, [#allocation7], 128, 128, 8
        $region16: #{tpu_custom_call.1} parent=11 // pred_fallthru
          _
        // Predicated region
        $region17: #{tpu_custom_call.1} parent=11 // pred_check
          %p240 = pneg %p117
        $region18: #{tpu_custom_call.1} parent=11 // pred_check_branch
          %242 = sbr.rel (%p240) target = $region20
        $region19: #{tpu_custom_call.1} parent=11 // pred_region
          %244 = vsyncadd [#allocation7], 0
          %s245 = sshll.u32 %s3, 4
          %s246 = int_to_ptr.hbm [resolvable:$true] %s245
          %s247 = sshll.u32 [#allocation8], 4
          %s248 = int_to_ptr.vmem [resolvable:$true] %s247
          %253 = dma.hbm_to_vmem [thread:$0]  %s246, 512, %s248, [#allocation7], 128, 128, 8
        $region20: #{tpu_custom_call.1} parent=11 // pred_fallthru
          _
        // Predicated region
        $region21: #{tpu_custom_call.1} parent=11 // pred_check
          %p254 = pneg %p138
        $region22: #{tpu_custom_call.1} parent=11 // pred_check_branch
          %256 = sbr.rel (%p254) target = $region24
        $region23: #{tpu_custom_call.1} parent=11 // pred_region
          _
        $region24: #{tpu_custom_call.1} parent=11 // pred_fallthru
          _
        // Predicated region
        $region25: #{tpu_custom_call.1} parent=11 // pred_check
          %p257 = pneg %p159
        $region26: #{tpu_custom_call.1} parent=11 // pred_check_branch
          %259 = sbr.rel (%p257) target = $region28
        $region27: #{tpu_custom_call.1} parent=11 // pred_region
          _
        $region28: #{tpu_custom_call.1} parent=11 // pred_fallthru
          _
      $region12: #{tpu_custom_call.1} parent=5 // pred_fallthru
        _
      %p260 = scmp.lt.s32.totalorder %s23, 2
      // Predicated region
      $region29: #{tpu_custom_call.1} parent=5 // pred_check
        %p261 = pneg %p260
      $region30: #{tpu_custom_call.1} parent=5 // pred_check_branch
        %263 = sbr.rel (%p261) target = $region32
      $region31: #{tpu_custom_call.1} parent=5 // pred_region
        // Predicated region
        $region33: #{tpu_custom_call.1} parent=31 // pred_check
          %p264 = pneg %p43
        $region34: #{tpu_custom_call.1} parent=31 // pred_check_branch
          %266 = sbr.rel (%p264) target = $region36
        $region35: #{tpu_custom_call.1} parent=31 // pred_region
          %s267 = sand.u32 %s33, 1
          %s268 = sand.u32 %s33, 1
          %s269 = smul.addr %s268, 32
          %s270 = scalar_lea.vmem [#allocation2], %s269
          %s271 = smul.u32 2, %s23
          %s272 = smul.addr %s271, 8
          %s273 = scalar_lea.vmem %s0, %s272
          // Predicated region
          $region37: #{tpu_custom_call.1} parent=35 // pred_check
            _
          $region38: #{tpu_custom_call.1} parent=35 // pred_check_branch
            %275 = sbr.rel (0) target = $region40
          $region39: #{tpu_custom_call.1} parent=35 // pred_region
            // Predicated region
            $region41: #{tpu_custom_call.1} parent=39 // pred_check
              _
            $region42: #{tpu_custom_call.1} parent=39 // pred_check_branch
              %277 = sbr.rel (0) target = $region44
            $region43: #{tpu_custom_call.1} parent=39 // pred_region
              loop: start=0, step=1, limit=1
              $region45: #{tpu_custom_call.1} parent=43 // loop_pre_header
                _
              $region46: #{tpu_custom_call.1} parent=43 // loop_header
                %s279 = sphi 0, %s283
                %p280 = scmp.ge.s32.totalorder %s279, 1
                %s284 = sphi %s273, %s273
                %s285 = sphi %s270, %s270
              $region47: #{tpu_custom_call.1} parent=43 // loop_header_branch
                %282 = sbr.rel (%p280) target = $region51
              $region48: #{tpu_custom_call.1} parent=43 // loop_body
                %v286 = vld [vmem:[%s284] sm:$0xff]
                %287 = vst [vmem:[%s285] sm:$0xff] %v286
                %v288 = vld [vmem:[%s284 + $0x8] sm:$0xff]
                %289 = vst [vmem:[%s285 + $0x8] sm:$0xff] %v288
                %v290 = vld [vmem:[%s284 + $0x20] sm:$0xff]
                %291 = vst [vmem:[%s285 + $0x10] sm:$0xff] %v290
                %v292 = vld [vmem:[%s284 + $0x28] sm:$0xff]
                %293 = vst [vmem:[%s285 + $0x18] sm:$0xff] %v292
              $region49: #{tpu_custom_call.1} parent=43 // loop_footer
                %s283 = sadd.s32 1, %s279
              $region50: #{tpu_custom_call.1} parent=43 // loop_footer_branch
                %278 = sbr.rel target = $region46
              $region51: #{tpu_custom_call.1} parent=43 // loop_exit
                _
            $region44: #{tpu_custom_call.1} parent=39 // pred_fallthru
              _
            // Predicated region
            $region52: #{tpu_custom_call.1} parent=39 // pred_check
              _
            $region53: #{tpu_custom_call.1} parent=39 // pred_check_branch
              %295 = sbr.rel target = $region55
            $region54: #{tpu_custom_call.1} parent=39 // pred_region
              _
            $region55: #{tpu_custom_call.1} parent=39 // pred_fallthru
              _
          $region40: #{tpu_custom_call.1} parent=35 // pred_fallthru
            _
          %296 = vnop
        $region36: #{tpu_custom_call.1} parent=31 // pred_fallthru
          _
        // Predicated region
        $region56: #{tpu_custom_call.1} parent=31 // pred_check
          %p297 = pneg %p69
        $region57: #{tpu_custom_call.1} parent=31 // pred_check_branch
          %299 = sbr.rel (%p297) target = $region59
        $region58: #{tpu_custom_call.1} parent=31 // pred_region
          %s300 = sand.u32 %s59, 1
          %s301 = scalar_lea.sflag [#allocation4], %s300
          %s302 = sand.u32 %s59, 1
          %s303 = smul.addr %s302, 8
          %s304 = scalar_lea.vmem [#allocation3], %s303
          %306 = vsyncadd %s301, 0
          %s307 = smul.addr %s23, 8
          %s308 = scalar_lea.hbm %s1, %s307
          %s310 = sshll.u32 %s308, 4
          %s311 = int_to_ptr.hbm [resolvable:$true] %s310
          %s312 = sshll.u32 %s304, 4
          %s313 = int_to_ptr.vmem [resolvable:$true] %s312
          %315 = dma.hbm_to_vmem [thread:$0]  %s311, 128, %s313, %s301
        $region59: #{tpu_custom_call.1} parent=31 // pred_fallthru
          _
        // Predicated region
        $region60: #{tpu_custom_call.1} parent=31 // pred_check
          %p316 = pneg %p179
        $region61: #{tpu_custom_call.1} parent=31 // pred_check_branch
          %318 = sbr.rel (%p316) target = $region63
        $region62: #{tpu_custom_call.1} parent=31 // pred_region
          %s319 = sand.u32 %s169, 1
          %s320 = scalar_lea.sflag [#allocation10], %s319
          %s321 = sand.u32 %s169, 1
          %s322 = smul.addr %s321, 8
          %s323 = scalar_lea.vmem [#allocation9], %s322
          %325 = vsyncadd %s320, 0
          %s326 = smul.addr %s23, 8
          %s327 = scalar_lea.hbm %s6, %s326
          %s329 = sshll.u32 %s327, 4
          %s330 = int_to_ptr.hbm [resolvable:$true] %s329
          %s331 = sshll.u32 %s323, 4
          %s332 = int_to_ptr.vmem [resolvable:$true] %s331
          %334 = dma.hbm_to_vmem [thread:$0]  %s330, 128, %s332, %s320
        $region63: #{tpu_custom_call.1} parent=31 // pred_fallthru
          _
      $region32: #{tpu_custom_call.1} parent=5 // pred_fallthru
        _
      %p335 = scmp.le.s32.totalorder 1, %s23
      %p336 = scmp.lt.s32.totalorder %s23, 3
      %p337 = pnand %p335, %p336
      %p338 = pneg %p337
      // Predicated region
      $region64: #{tpu_custom_call.1} parent=5 // pred_check
        _
      $region65: #{tpu_custom_call.1} parent=5 // pred_check_branch
        %340 = sbr.rel (%p337) target = $region67
      $region66: #{tpu_custom_call.1} parent=5 // pred_region
        %s341 = ssub.s32 %s23, 1
        %s342 = sand.u32 %s36, 1
        %s343 = sand.u32 %s36, 1
        %s344 = smul.addr %s343, 32
        %s345 = scalar_lea.vmem [#allocation2], %s344
        // Predicated region
        $region68: #{tpu_custom_call.1} parent=66 // pred_check
          %p346 = pneg %p49
        $region69: #{tpu_custom_call.1} parent=66 // pred_check_branch
          %348 = sbr.rel (%p346) target = $region71
        $region70: #{tpu_custom_call.1} parent=66 // pred_region
          _
        $region71: #{tpu_custom_call.1} parent=66 // pred_fallthru
          _
        %s349 = sand.u32 %s62, 1
        %s350 = scalar_lea.sflag [#allocation4], %s349
        %s351 = sand.u32 %s62, 1
        %s352 = smul.addr %s351, 8
        %s353 = scalar_lea.vmem [#allocation3], %s352
        // Predicated region
        $region72: #{tpu_custom_call.1} parent=66 // pred_check
          %p354 = pneg %p75
        $region73: #{tpu_custom_call.1} parent=66 // pred_check_branch
          %356 = sbr.rel (%p354) target = $region75
        $region74: #{tpu_custom_call.1} parent=66 // pred_region
          %358 = dma.done %s350, 128
        $region75: #{tpu_custom_call.1} parent=66 // pred_fallthru
          _
        // Predicated region
        $region76: #{tpu_custom_call.1} parent=66 // pred_check
          %p359 = pneg %p96
        $region77: #{tpu_custom_call.1} parent=66 // pred_check_branch
          %361 = sbr.rel (%p359) target = $region79
        $region78: #{tpu_custom_call.1} parent=66 // pred_region
          %363 = dma.done [#allocation7], 512
        $region79: #{tpu_custom_call.1} parent=66 // pred_fallthru
          _
        // Predicated region
        $region80: #{tpu_custom_call.1} parent=66 // pred_check
          %p364 = pneg %p117
        $region81: #{tpu_custom_call.1} parent=66 // pred_check_branch
          %366 = sbr.rel (%p364) target = $region83
        $region82: #{tpu_custom_call.1} parent=66 // pred_region
          %368 = dma.done [#allocation7], 512
        $region83: #{tpu_custom_call.1} parent=66 // pred_fallthru
          _
        %s369 = sand.u32 %s172, 1
        %s370 = scalar_lea.sflag [#allocation10], %s369
        %s371 = sand.u32 %s172, 1
        %s372 = smul.addr %s371, 8
        %s373 = scalar_lea.vmem [#allocation9], %s372
        // Predicated region
        $region84: #{tpu_custom_call.1} parent=66 // pred_check
          %p374 = pneg %p185
        $region85: #{tpu_custom_call.1} parent=66 // pred_check_branch
          %376 = sbr.rel (%p374) target = $region87
        $region86: #{tpu_custom_call.1} parent=66 // pred_region
          %378 = dma.done %s370, 128
        $region87: #{tpu_custom_call.1} parent=66 // pred_fallthru
          _
        %s379 = sand.u32 %s36, 1
        %s380 = sand.u32 %s36, 1
        %s381 = smul.addr %s380, 32
        %s382 = scalar_lea.vmem [#allocation2], %s381
        %p383 = pneg %p49
        %p384 = pneg %p46
        %s385 = sand.u32 %s62, 1
        %s386 = scalar_lea.sflag [#allocation4], %s385
        %s387 = sand.u32 %s62, 1
        %s388 = smul.addr %s387, 8
        %s389 = scalar_lea.vmem [#allocation3], %s388
        %p390 = pneg %p75
        %p391 = pneg %p72
        %p392 = pneg %p96
        %p393 = pneg %p93
        %p394 = pneg %p117
        %p395 = pneg %p114
        %p396 = pneg %p138
        %p397 = pneg %p135
        %p398 = pneg %p159
        %p399 = pneg %p156
        %s400 = sand.u32 %s172, 1
        %s401 = scalar_lea.sflag [#allocation10], %s400
        %s402 = sand.u32 %s172, 1
        %s403 = smul.addr %s402, 8
        %s404 = scalar_lea.vmem [#allocation9], %s403
        %p405 = pneg %p185
        %p406 = pneg %p182
        %p407 = pneg %p211
        %p408 = pneg %p208
        %s409 = sand.u32 %s198, 1
        %s410 = scalar_lea.sflag [#allocation5], %s409
        %s411 = sand.u32 %s198, 1
        %s412 = smul.addr %s411, 8
        %s413 = scalar_lea.vmem [#allocation11], %s412
        %s414 = smul.u32 2, %s28
        %v415 = vld [vmem:[#allocation8] sm:$0xff]
        %v416 = vld [vmem:[#allocation8 + $0x8] sm:$0xff]
        %v417 = vld [vmem:[#allocation8 + $0x10] sm:$0xff]
        %v418 = vld [vmem:[#allocation8 + $0x18] sm:$0xff]
        %v419 = vld [vmem:[%s353] sm:$0xff]
        %v420 = vld [vmem:[%s4] sm:$0xff]
        %v421 = vld [vmem:[%s4 + $0x8] sm:$0xff]
        %v422 = vld [vmem:[%s4 + $0x10] sm:$0xff]
        %v423 = vld [vmem:[%s4 + $0x18] sm:$0xff]
        %425 = vset.pattern.permute.xlu0 0
        %426 = vperm.xlu0 %425, %v420
        %v427 = vpop.permute.xlu0 %426
        %430 = vset.pattern.permute.xlu0 0
        %431 = vperm.xlu0 %430, %v421
        %v432 = vpop.permute.xlu0 %431
        %435 = vset.pattern.permute.xlu0 0
        %436 = vperm.xlu0 %435, %v422
        %v437 = vpop.permute.xlu0 %436
        %440 = vset.pattern.permute.xlu0 0
        %441 = vperm.xlu0 %440, %v423
        %v442 = vpop.permute.xlu0 %441
        %vm444 = vcmask 261120
        %v446 = vsel %vm444, %v415, 0
        %v449 = vsel %vm444, %v416, 0
        %v452 = vsel %vm444, %v417, 0
        %v455 = vsel %vm444, %v418, 0
        %v458 = vsel %vm444, %v419, 0
        %460 = vmatpush.xpose.msra.mxu0 0.0
        %461 = vmatpush.xpose.msra.mxu0 0.0
        %462 = vmatpush.xpose.msra.mxu0 0.0
        %463 = vmatpush.xpose.msra.mxu0 0.0
        %464 = vmatpush.xpose.msra.mxu0 0.0
        %465 = vmatpush.xpose.msra.mxu0 0.0
        %466 = vmatpush.xpose.msra.mxu0 0.0
        %467 = vmatpush.xpose.msra.mxu0 0.0
        %468 = vmatpush.xpose.msra.mxu0 0.0
        %469 = vmatpush.xpose.msra.mxu0 0.0
        %470 = vmatpush.xpose.msra.mxu0 0.0
        %471 = vmatpush.xpose.msra.mxu0 0.0
        %472 = vmatpush.xpose.msra.mxu0 0.0
        %473 = vmatpush.xpose.msra.mxu0 0.0
        %474 = vmatpush.xpose.msra.mxu0 0.0
        %475 = vmatpush.xpose.msra.mxu0 %v458
        %476 = vmatmul.f32.gmra.mxu0 %v446
        %v477 = vpop.f32.mrf.mxu0
        %v478 = vadd.f32 %v427, %v477
        %479 = vmatmul.f32.gmra.mxu0 %v449
        %v480 = vpop.f32.mrf.mxu0
        %v481 = vadd.f32 %v432, %v480
        %482 = vmatmul.f32.gmra.mxu0 %v452
        %v483 = vpop.f32.mrf.mxu0
        %v484 = vadd.f32 %v437, %v483
        %485 = vmatmul.f32.gmra.mxu0 %v455
        %v486 = vpop.f32.mrf.mxu0
        %v487 = vadd.f32 %v442, %v486
        %488 = vdwg.mxu0
        %v489 = vld [vmem:[#allocation6] sm:$0xff]
        %v490 = vld [vmem:[#allocation6 + $0x8] sm:$0xff]
        %v491 = vld [vmem:[#allocation6 + $0x10] sm:$0xff]
        %v492 = vld [vmem:[#allocation6 + $0x18] sm:$0xff]
        %v493 = vld [vmem:[%s5] sm:$0xff]
        %v494 = vld [vmem:[%s5 + $0x8] sm:$0xff]
        %v495 = vld [vmem:[%s5 + $0x10] sm:$0xff]
        %v496 = vld [vmem:[%s5 + $0x18] sm:$0xff]
        %v497 = vld [vmem:[%s345] sm:$0xff]
        %v498 = vld [vmem:[%s345 + $0x10] sm:$0xf]
        %500 = vset.pattern.permute.xlu0 0
        %501 = vperm.xlu0 %500, %v478
        %v502 = vpop.permute.xlu0 %501
        %505 = vset.pattern.permute.xlu0 0
        %506 = vperm.xlu0 %505, %v481
        %v507 = vpop.permute.xlu0 %506
        %510 = vset.pattern.permute.xlu0 0
        %511 = vperm.xlu0 %510, %v484
        %v512 = vpop.permute.xlu0 %511
        %515 = vset.pattern.permute.xlu0 0
        %516 = vperm.xlu0 %515, %v487
        %v517 = vpop.permute.xlu0 %516
        %v520 = vsel %vm444, %v489, 0
        %v523 = vsel %vm444, %v490, 0
        %v526 = vsel %vm444, %v491, 0
        %v529 = vsel %vm444, %v492, 0
        %v532 = vsel %vm444, %v497, 0
        %v535 = vsel %vm444, %v498, 0
        %537 = vmatpush.xpose.msra.mxu0 0.0
        %538 = vmatpush.xpose.msra.mxu0 0.0
        %539 = vmatpush.xpose.msra.mxu0 0.0
        %540 = vmatpush.xpose.msra.mxu0 0.0
        %541 = vmatpush.xpose.msra.mxu0 0.0
        %542 = vmatpush.xpose.msra.mxu0 0.0
        %543 = vmatpush.xpose.msra.mxu0 0.0
        %544 = vmatpush.xpose.msra.mxu0 0.0
        %545 = vmatpush.xpose.msra.mxu0 0.0
        %546 = vmatpush.xpose.msra.mxu0 0.0
        %547 = vmatpush.xpose.msra.mxu0 0.0
        %548 = vmatpush.xpose.msra.mxu0 0.0
        %549 = vmatpush.xpose.msra.mxu0 0.0
        %550 = vmatpush.xpose.msra.mxu0 0.0
        %551 = vmatpush.xpose.msra.mxu0 %v535
        %552 = vmatpush.xpose.msra.mxu0 %v532
        %553 = vmatmul.f32.gmra.mxu0 %v520
        %v554 = vpop.f32.mrf.mxu0
        %v555 = vadd.f32 %v502, %v554
        %556 = vmatmul.f32.gmra.mxu0 %v523
        %v557 = vpop.f32.mrf.mxu0
        %v558 = vadd.f32 %v507, %v557
        %559 = vmatmul.f32.gmra.mxu0 %v526
        %v560 = vpop.f32.mrf.mxu0
        %v561 = vadd.f32 %v512, %v560
        %562 = vmatmul.f32.gmra.mxu0 %v529
        %v563 = vpop.f32.mrf.mxu0
        %v564 = vadd.f32 %v517, %v563
        %565 = vdwg.mxu0
        %v566 = vtanh.pop %v555
        %v567 = vtanh.pop %v558
        %v568 = vtanh.pop %v561
        %v569 = vtanh.pop %v564
        %571 = vset.pattern.permute.xlu0 0
        %572 = vperm.xlu0 %571, %v493
        %v573 = vpop.permute.xlu0 %572
        %576 = vset.pattern.permute.xlu0 0
        %577 = vperm.xlu0 %576, %v494
        %v578 = vpop.permute.xlu0 %577
        %581 = vset.pattern.permute.xlu0 0
        %582 = vperm.xlu0 %581, %v495
        %v583 = vpop.permute.xlu0 %582
        %586 = vset.pattern.permute.xlu0 0
        %587 = vperm.xlu0 %586, %v496
        %v588 = vpop.permute.xlu0 %587
        %v590 = vmul.f32 %v566, %v573
        %v591 = vmul.f32 %v567, %v578
        %v592 = vmul.f32 %v568, %v583
        %v593 = vmul.f32 %v569, %v588
        %vm594 = vcmask 97280
        %v595 = vsel %vm594, %v590, 0.0
        %v596 = vsel %vm594, %v591, 0.0
        %v597 = vadd.f32 %v595, %v596
        %v598 = vsel %vm594, %v592, 0.0
        %v599 = vadd.f32 %v597, %v598
        %v600 = vsel %vm594, %v593, 0.0
        %v601 = vadd.f32 %v599, %v600
        %v602 = vrot.slane %v601, 4
        %v603 = vadd.f32 %v601, %v602
        %v604 = vrot.slane %v603, 2
        %v605 = vadd.f32 %v603, %v604
        %v606 = vrot.slane %v605, 1
        %v607 = vadd.f32 %v605, %v606
        %v608 = vld [vmem:[%s373] sm:$0x1]
        %vm609 = vcmp.eq.s32.totalorder %v608, 0
        %v610 = vsel %vm609, -1e+10, %v607
        %vm611 = vcmask 90112
        %v612 = vsel %vm611, %v610, -inf
        %613 = vmax.xlane.f32.xlu0 %v612
        %v614 = vpop.xlane.xlu0 %613
        %v615 = vsub.f32 %v610, %v614
        %v616 = vmul.f32 %v615, 1.442695
        %v617 = vpow.pop %v616
        %v618 = vsel %vm611, %v617, 0.0
        %619 = vadd.xlane.f32.xlu0 %v618
        %v620 = vpop.xlane.xlu0 %619
        %v621 = vrcp.pop %v620
        %v622 = vmul.f32 %v617, %v621
        %623 = vst.msk [vmem:[%s413] sm:$0x1] %vm611, %v622
        %v624 = vld [vmem:[%s345] sm:$0xff]
        %v625 = vld [vmem:[%s345 + $0x10] sm:$0xf]
        %626 = vset.pattern.permute.xlu0 1
        %627 = vperm.xlu0 %626, %v478
        %v628 = vpop.permute.xlu0 %627
        %630 = vset.pattern.permute.xlu0 1
        %631 = vperm.xlu0 %630, %v481
        %v632 = vpop.permute.xlu0 %631
        %634 = vset.pattern.permute.xlu0 1
        %635 = vperm.xlu0 %634, %v484
        %v636 = vpop.permute.xlu0 %635
        %638 = vset.pattern.permute.xlu0 1
        %639 = vperm.xlu0 %638, %v487
        %v640 = vpop.permute.xlu0 %639
        %644 = vrot.lane.b32.xlu0 %v624, 96
        %v645 = vpop.permute.xlu0 %644
        %646 = vrot.lane.b32.xlu0 %v625, 96
        %v647 = vpop.permute.xlu0 %646
        %v648 = vsel %vm444, %v645, 0
        %v650 = vsel %vm444, %v647, 0
        %652 = vmatpush.xpose.msra.mxu0 0.0
        %653 = vmatpush.xpose.msra.mxu0 0.0
        %654 = vmatpush.xpose.msra.mxu0 0.0
        %655 = vmatpush.xpose.msra.mxu0 0.0
        %656 = vmatpush.xpose.msra.mxu0 0.0
        %657 = vmatpush.xpose.msra.mxu0 0.0
        %658 = vmatpush.xpose.msra.mxu0 0.0
        %659 = vmatpush.xpose.msra.mxu0 0.0
        %660 = vmatpush.xpose.msra.mxu0 0.0
        %661 = vmatpush.xpose.msra.mxu0 0.0
        %662 = vmatpush.xpose.msra.mxu0 0.0
        %663 = vmatpush.xpose.msra.mxu0 0.0
        %664 = vmatpush.xpose.msra.mxu0 0.0
        %665 = vmatpush.xpose.msra.mxu0 0.0
        %666 = vmatpush.xpose.msra.mxu0 %v650
        %667 = vmatpush.xpose.msra.mxu0 %v648
        %668 = vmatmul.f32.gmra.mxu0 %v520
        %v669 = vpop.f32.mrf.mxu0
        %v670 = vadd.f32 %v628, %v669
        %671 = vmatmul.f32.gmra.mxu0 %v523
        %v672 = vpop.f32.mrf.mxu0
        %v673 = vadd.f32 %v632, %v672
        %674 = vmatmul.f32.gmra.mxu0 %v526
        %v675 = vpop.f32.mrf.mxu0
        %v676 = vadd.f32 %v636, %v675
        %677 = vmatmul.f32.gmra.mxu0 %v529
        %v678 = vpop.f32.mrf.mxu0
        %v679 = vadd.f32 %v640, %v678
        %680 = vdwg.mxu0
        %v681 = vtanh.pop %v670
        %v682 = vtanh.pop %v673
        %v683 = vtanh.pop %v676
        %v684 = vtanh.pop %v679
        %v685 = vmul.f32 %v681, %v573
        %v686 = vmul.f32 %v682, %v578
        %v687 = vmul.f32 %v683, %v583
        %v688 = vmul.f32 %v684, %v588
        %v689 = vsel %vm594, %v685, 0.0
        %v690 = vsel %vm594, %v686, 0.0
        %v691 = vadd.f32 %v689, %v690
        %v692 = vsel %vm594, %v687, 0.0
        %v693 = vadd.f32 %v691, %v692
        %v694 = vsel %vm594, %v688, 0.0
        %v695 = vadd.f32 %v693, %v694
        %v696 = vrot.slane %v695, 4
        %v697 = vadd.f32 %v695, %v696
        %v698 = vrot.slane %v697, 2
        %v699 = vadd.f32 %v697, %v698
        %v700 = vrot.slane %v699, 1
        %v701 = vadd.f32 %v699, %v700
        %v702 = vld [vmem:[%s373 + $0x1] sm:$0x1]
        %vm703 = vcmp.eq.s32.totalorder %v702, 0
        %v704 = vsel %vm703, -1e+10, %v701
        %v705 = vsel %vm611, %v704, -inf
        %706 = vmax.xlane.f32.xlu0 %v705
        %v707 = vpop.xlane.xlu0 %706
        %v708 = vsub.f32 %v704, %v707
        %v709 = vmul.f32 %v708, 1.442695
        %v710 = vpow.pop %v709
        %v711 = vsel %vm611, %v710, 0.0
        %712 = vadd.xlane.f32.xlu0 %v711
        %v713 = vpop.xlane.xlu0 %712
        %v714 = vrcp.pop %v713
        %v715 = vmul.f32 %v710, %v714
        %716 = vst.msk [vmem:[%s413 + $0x1] sm:$0x1] %vm611, %v715
        %v717 = vld [vmem:[%s345] sm:$0xff]
        %v718 = vld [vmem:[%s345 + $0x10] sm:$0xf]
        %719 = vset.pattern.permute.xlu0 2
        %720 = vperm.xlu0 %719, %v478
        %v721 = vpop.permute.xlu0 %720
        %723 = vset.pattern.permute.xlu0 2
        %724 = vperm.xlu0 %723, %v481
        %v725 = vpop.permute.xlu0 %724
        %727 = vset.pattern.permute.xlu0 2
        %728 = vperm.xlu0 %727, %v484
        %v729 = vpop.permute.xlu0 %728
        %731 = vset.pattern.permute.xlu0 2
        %732 = vperm.xlu0 %731, %v487
        %v733 = vpop.permute.xlu0 %732
        %737 = vrot.lane.b32.xlu0 %v717, 64
        %v738 = vpop.permute.xlu0 %737
        %739 = vrot.lane.b32.xlu0 %v718, 64
        %v740 = vpop.permute.xlu0 %739
        %v741 = vsel %vm444, %v738, 0
        %v743 = vsel %vm444, %v740, 0
        %745 = vmatpush.xpose.msra.mxu0 0.0
        %746 = vmatpush.xpose.msra.mxu0 0.0
        %747 = vmatpush.xpose.msra.mxu0 0.0
        %748 = vmatpush.xpose.msra.mxu0 0.0
        %749 = vmatpush.xpose.msra.mxu0 0.0
        %750 = vmatpush.xpose.msra.mxu0 0.0
        %751 = vmatpush.xpose.msra.mxu0 0.0
        %752 = vmatpush.xpose.msra.mxu0 0.0
        %753 = vmatpush.xpose.msra.mxu0 0.0
        %754 = vmatpush.xpose.msra.mxu0 0.0
        %755 = vmatpush.xpose.msra.mxu0 0.0
        %756 = vmatpush.xpose.msra.mxu0 0.0
        %757 = vmatpush.xpose.msra.mxu0 0.0
        %758 = vmatpush.xpose.msra.mxu0 0.0
        %759 = vmatpush.xpose.msra.mxu0 %v743
        %760 = vmatpush.xpose.msra.mxu0 %v741
        %761 = vmatmul.f32.gmra.mxu0 %v520
        %v762 = vpop.f32.mrf.mxu0
        %v763 = vadd.f32 %v721, %v762
        %764 = vmatmul.f32.gmra.mxu0 %v523
        %v765 = vpop.f32.mrf.mxu0
        %v766 = vadd.f32 %v725, %v765
        %767 = vmatmul.f32.gmra.mxu0 %v526
        %v768 = vpop.f32.mrf.mxu0
        %v769 = vadd.f32 %v729, %v768
        %770 = vmatmul.f32.gmra.mxu0 %v529
        %v771 = vpop.f32.mrf.mxu0
        %v772 = vadd.f32 %v733, %v771
        %773 = vdwg.mxu0
        %v774 = vtanh.pop %v763
        %v775 = vtanh.pop %v766
        %v776 = vtanh.pop %v769
        %v777 = vtanh.pop %v772
        %v778 = vmul.f32 %v774, %v573
        %v779 = vmul.f32 %v775, %v578
        %v780 = vmul.f32 %v776, %v583
        %v781 = vmul.f32 %v777, %v588
        %v782 = vsel %vm594, %v778, 0.0
        %v783 = vsel %vm594, %v779, 0.0
        %v784 = vadd.f32 %v782, %v783
        %v785 = vsel %vm594, %v780, 0.0
        %v786 = vadd.f32 %v784, %v785
        %v787 = vsel %vm594, %v781, 0.0
        %v788 = vadd.f32 %v786, %v787
        %v789 = vrot.slane %v788, 4
        %v790 = vadd.f32 %v788, %v789
        %v791 = vrot.slane %v790, 2
        %v792 = vadd.f32 %v790, %v791
        %v793 = vrot.slane %v792, 1
        %v794 = vadd.f32 %v792, %v793
        %v795 = vld [vmem:[%s373 + $0x2] sm:$0x1]
        %vm796 = vcmp.eq.s32.totalorder %v795, 0
        %v797 = vsel %vm796, -1e+10, %v794
        %v798 = vsel %vm611, %v797, -inf
        %799 = vmax.xlane.f32.xlu0 %v798
        %v800 = vpop.xlane.xlu0 %799
        %v801 = vsub.f32 %v797, %v800
        %v802 = vmul.f32 %v801, 1.442695
        %v803 = vpow.pop %v802
        %v804 = vsel %vm611, %v803, 0.0
        %805 = vadd.xlane.f32.xlu0 %v804
        %v806 = vpop.xlane.xlu0 %805
        %v807 = vrcp.pop %v806
        %v808 = vmul.f32 %v803, %v807
        %809 = vst.msk [vmem:[%s413 + $0x2] sm:$0x1] %vm611, %v808
        %v810 = vld [vmem:[%s345] sm:$0xff]
        %v811 = vld [vmem:[%s345 + $0x10] sm:$0xf]
        %812 = vset.pattern.permute.xlu0 3
        %813 = vperm.xlu0 %812, %v478
        %v814 = vpop.permute.xlu0 %813
        %816 = vset.pattern.permute.xlu0 3
        %817 = vperm.xlu0 %816, %v481
        %v818 = vpop.permute.xlu0 %817
        %820 = vset.pattern.permute.xlu0 3
        %821 = vperm.xlu0 %820, %v484
        %v822 = vpop.permute.xlu0 %821
        %824 = vset.pattern.permute.xlu0 3
        %825 = vperm.xlu0 %824, %v487
        %v826 = vpop.permute.xlu0 %825
        %830 = vrot.lane.b32.xlu0 %v810, 32
        %v831 = vpop.permute.xlu0 %830
        %832 = vrot.lane.b32.xlu0 %v811, 32
        %v833 = vpop.permute.xlu0 %832
        %v834 = vsel %vm444, %v831, 0
        %v836 = vsel %vm444, %v833, 0
        %838 = vmatpush.xpose.msra.mxu0 0.0
        %839 = vmatpush.xpose.msra.mxu0 0.0
        %840 = vmatpush.xpose.msra.mxu0 0.0
        %841 = vmatpush.xpose.msra.mxu0 0.0
        %842 = vmatpush.xpose.msra.mxu0 0.0
        %843 = vmatpush.xpose.msra.mxu0 0.0
        %844 = vmatpush.xpose.msra.mxu0 0.0
        %845 = vmatpush.xpose.msra.mxu0 0.0
        %846 = vmatpush.xpose.msra.mxu0 0.0
        %847 = vmatpush.xpose.msra.mxu0 0.0
        %848 = vmatpush.xpose.msra.mxu0 0.0
        %849 = vmatpush.xpose.msra.mxu0 0.0
        %850 = vmatpush.xpose.msra.mxu0 0.0
        %851 = vmatpush.xpose.msra.mxu0 0.0
        %852 = vmatpush.xpose.msra.mxu0 %v836
        %853 = vmatpush.xpose.msra.mxu0 %v834
        %854 = vmatmul.f32.gmra.mxu0 %v520
        %v855 = vpop.f32.mrf.mxu0
        %v856 = vadd.f32 %v814, %v855
        %857 = vmatmul.f32.gmra.mxu0 %v523
        %v858 = vpop.f32.mrf.mxu0
        %v859 = vadd.f32 %v818, %v858
        %860 = vmatmul.f32.gmra.mxu0 %v526
        %v861 = vpop.f32.mrf.mxu0
        %v862 = vadd.f32 %v822, %v861
        %863 = vmatmul.f32.gmra.mxu0 %v529
        %v864 = vpop.f32.mrf.mxu0
        %v865 = vadd.f32 %v826, %v864
        %866 = vdwg.mxu0
        %v867 = vtanh.pop %v856
        %v868 = vtanh.pop %v859
        %v869 = vtanh.pop %v862
        %v870 = vtanh.pop %v865
        %v871 = vmul.f32 %v867, %v573
        %v872 = vmul.f32 %v868, %v578
        %v873 = vmul.f32 %v869, %v583
        %v874 = vmul.f32 %v870, %v588
        %v875 = vsel %vm594, %v871, 0.0
        %v876 = vsel %vm594, %v872, 0.0
        %v877 = vadd.f32 %v875, %v876
        %v878 = vsel %vm594, %v873, 0.0
        %v879 = vadd.f32 %v877, %v878
        %v880 = vsel %vm594, %v874, 0.0
        %v881 = vadd.f32 %v879, %v880
        %v882 = vrot.slane %v881, 4
        %v883 = vadd.f32 %v881, %v882
        %v884 = vrot.slane %v883, 2
        %v885 = vadd.f32 %v883, %v884
        %v886 = vrot.slane %v885, 1
        %v887 = vadd.f32 %v885, %v886
        %v888 = vld [vmem:[%s373 + $0x3] sm:$0x1]
        %vm889 = vcmp.eq.s32.totalorder %v888, 0
        %v890 = vsel %vm889, -1e+10, %v887
        %v891 = vsel %vm611, %v890, -inf
        %892 = vmax.xlane.f32.xlu0 %v891
        %v893 = vpop.xlane.xlu0 %892
        %v894 = vsub.f32 %v890, %v893
        %v895 = vmul.f32 %v894, 1.442695
        %v896 = vpow.pop %v895
        %v897 = vsel %vm611, %v896, 0.0
        %898 = vadd.xlane.f32.xlu0 %v897
        %v899 = vpop.xlane.xlu0 %898
        %v900 = vrcp.pop %v899
        %v901 = vmul.f32 %v896, %v900
        %902 = vst.msk [vmem:[%s413 + $0x3] sm:$0x1] %vm611, %v901
        %v903 = vld [vmem:[%s345 + $0x8] sm:$0xff]
        %v904 = vld [vmem:[%s345 + $0x18] sm:$0xf]
        %905 = vset.pattern.permute.xlu0 4
        %906 = vperm.xlu0 %905, %v478
        %v907 = vpop.permute.xlu0 %906
        %909 = vset.pattern.permute.xlu0 4
        %910 = vperm.xlu0 %909, %v481
        %v911 = vpop.permute.xlu0 %910
        %913 = vset.pattern.permute.xlu0 4
        %914 = vperm.xlu0 %913, %v484
        %v915 = vpop.permute.xlu0 %914
        %917 = vset.pattern.permute.xlu0 4
        %918 = vperm.xlu0 %917, %v487
        %v919 = vpop.permute.xlu0 %918
        %v922 = vsel %vm444, %v903, 0
        %v925 = vsel %vm444, %v904, 0
        %927 = vmatpush.xpose.msra.mxu0 0.0
        %928 = vmatpush.xpose.msra.mxu0 0.0
        %929 = vmatpush.xpose.msra.mxu0 0.0
        %930 = vmatpush.xpose.msra.mxu0 0.0
        %931 = vmatpush.xpose.msra.mxu0 0.0
        %932 = vmatpush.xpose.msra.mxu0 0.0
        %933 = vmatpush.xpose.msra.mxu0 0.0
        %934 = vmatpush.xpose.msra.mxu0 0.0
        %935 = vmatpush.xpose.msra.mxu0 0.0
        %936 = vmatpush.xpose.msra.mxu0 0.0
        %937 = vmatpush.xpose.msra.mxu0 0.0
        %938 = vmatpush.xpose.msra.mxu0 0.0
        %939 = vmatpush.xpose.msra.mxu0 0.0
        %940 = vmatpush.xpose.msra.mxu0 0.0
        %941 = vmatpush.xpose.msra.mxu0 %v925
        %942 = vmatpush.xpose.msra.mxu0 %v922
        %943 = vmatmul.f32.gmra.mxu0 %v520
        %v944 = vpop.f32.mrf.mxu0
        %v945 = vadd.f32 %v907, %v944
        %946 = vmatmul.f32.gmra.mxu0 %v523
        %v947 = vpop.f32.mrf.mxu0
        %v948 = vadd.f32 %v911, %v947
        %949 = vmatmul.f32.gmra.mxu0 %v526
        %v950 = vpop.f32.mrf.mxu0
        %v951 = vadd.f32 %v915, %v950
        %952 = vmatmul.f32.gmra.mxu0 %v529
        %v953 = vpop.f32.mrf.mxu0
        %v954 = vadd.f32 %v919, %v953
        %955 = vdwg.mxu0
        %v956 = vtanh.pop %v945
        %v957 = vtanh.pop %v948
        %v958 = vtanh.pop %v951
        %v959 = vtanh.pop %v954
        %v960 = vmul.f32 %v956, %v573
        %v961 = vmul.f32 %v957, %v578
        %v962 = vmul.f32 %v958, %v583
        %v963 = vmul.f32 %v959, %v588
        %v964 = vsel %vm594, %v960, 0.0
        %v965 = vsel %vm594, %v961, 0.0
        %v966 = vadd.f32 %v964, %v965
        %v967 = vsel %vm594, %v962, 0.0
        %v968 = vadd.f32 %v966, %v967
        %v969 = vsel %vm594, %v963, 0.0
        %v970 = vadd.f32 %v968, %v969
        %v971 = vrot.slane %v970, 4
        %v972 = vadd.f32 %v970, %v971
        %v973 = vrot.slane %v972, 2
        %v974 = vadd.f32 %v972, %v973
        %v975 = vrot.slane %v974, 1
        %v976 = vadd.f32 %v974, %v975
        %v977 = vld [vmem:[%s373 + $0x4] sm:$0x1]
        %vm978 = vcmp.eq.s32.totalorder %v977, 0
        %v979 = vsel %vm978, -1e+10, %v976
        %v980 = vsel %vm611, %v979, -inf
        %981 = vmax.xlane.f32.xlu0 %v980
        %v982 = vpop.xlane.xlu0 %981
        %v983 = vsub.f32 %v979, %v982
        %v984 = vmul.f32 %v983, 1.442695
        %v985 = vpow.pop %v984
        %v986 = vsel %vm611, %v985, 0.0
        %987 = vadd.xlane.f32.xlu0 %v986
        %v988 = vpop.xlane.xlu0 %987
        %v989 = vrcp.pop %v988
        %v990 = vmul.f32 %v985, %v989
        %991 = vst.msk [vmem:[%s413 + $0x4] sm:$0x1] %vm611, %v990
        %v992 = vld [vmem:[%s345 + $0x8] sm:$0xff]
        %v993 = vld [vmem:[%s345 + $0x18] sm:$0xf]
        %994 = vset.pattern.permute.xlu0 5
        %995 = vperm.xlu0 %994, %v478
        %v996 = vpop.permute.xlu0 %995
        %998 = vset.pattern.permute.xlu0 5
        %999 = vperm.xlu0 %998, %v481
        %v1000 = vpop.permute.xlu0 %999
        %1002 = vset.pattern.permute.xlu0 5
        %1003 = vperm.xlu0 %1002, %v484
        %v1004 = vpop.permute.xlu0 %1003
        %1006 = vset.pattern.permute.xlu0 5
        %1007 = vperm.xlu0 %1006, %v487
        %v1008 = vpop.permute.xlu0 %1007
        %1012 = vrot.lane.b32.xlu0 %v992, 96
        %v1013 = vpop.permute.xlu0 %1012
        %1014 = vrot.lane.b32.xlu0 %v993, 96
        %v1015 = vpop.permute.xlu0 %1014
        %v1016 = vsel %vm444, %v1013, 0
        %v1018 = vsel %vm444, %v1015, 0
        %1020 = vmatpush.xpose.msra.mxu0 0.0
        %1021 = vmatpush.xpose.msra.mxu0 0.0
        %1022 = vmatpush.xpose.msra.mxu0 0.0
        %1023 = vmatpush.xpose.msra.mxu0 0.0
        %1024 = vmatpush.xpose.msra.mxu0 0.0
        %1025 = vmatpush.xpose.msra.mxu0 0.0
        %1026 = vmatpush.xpose.msra.mxu0 0.0
        %1027 = vmatpush.xpose.msra.mxu0 0.0
        %1028 = vmatpush.xpose.msra.mxu0 0.0
        %1029 = vmatpush.xpose.msra.mxu0 0.0
        %1030 = vmatpush.xpose.msra.mxu0 0.0
        %1031 = vmatpush.xpose.msra.mxu0 0.0
        %1032 = vmatpush.xpose.msra.mxu0 0.0
        %1033 = vmatpush.xpose.msra.mxu0 0.0
        %1034 = vmatpush.xpose.msra.mxu0 %v1018
        %1035 = vmatpush.xpose.msra.mxu0 %v1016
        %1036 = vmatmul.f32.gmra.mxu0 %v520
        %v1037 = vpop.f32.mrf.mxu0
        %v1038 = vadd.f32 %v996, %v1037
        %1039 = vmatmul.f32.gmra.mxu0 %v523
        %v1040 = vpop.f32.mrf.mxu0
        %v1041 = vadd.f32 %v1000, %v1040
        %1042 = vmatmul.f32.gmra.mxu0 %v526
        %v1043 = vpop.f32.mrf.mxu0
        %v1044 = vadd.f32 %v1004, %v1043
        %1045 = vmatmul.f32.gmra.mxu0 %v529
        %v1046 = vpop.f32.mrf.mxu0
        %v1047 = vadd.f32 %v1008, %v1046
        %1048 = vdwg.mxu0
        %v1049 = vtanh.pop %v1038
        %v1050 = vtanh.pop %v1041
        %v1051 = vtanh.pop %v1044
        %v1052 = vtanh.pop %v1047
        %v1053 = vmul.f32 %v1049, %v573
        %v1054 = vmul.f32 %v1050, %v578
        %v1055 = vmul.f32 %v1051, %v583
        %v1056 = vmul.f32 %v1052, %v588
        %v1057 = vsel %vm594, %v1053, 0.0
        %v1058 = vsel %vm594, %v1054, 0.0
        %v1059 = vadd.f32 %v1057, %v1058
        %v1060 = vsel %vm594, %v1055, 0.0
        %v1061 = vadd.f32 %v1059, %v1060
        %v1062 = vsel %vm594, %v1056, 0.0
        %v1063 = vadd.f32 %v1061, %v1062
        %v1064 = vrot.slane %v1063, 4
        %v1065 = vadd.f32 %v1063, %v1064
        %v1066 = vrot.slane %v1065, 2
        %v1067 = vadd.f32 %v1065, %v1066
        %v1068 = vrot.slane %v1067, 1
        %v1069 = vadd.f32 %v1067, %v1068
        %v1070 = vld [vmem:[%s373 + $0x5] sm:$0x1]
        %vm1071 = vcmp.eq.s32.totalorder %v1070, 0
        %v1072 = vsel %vm1071, -1e+10, %v1069
        %v1073 = vsel %vm611, %v1072, -inf
        %1074 = vmax.xlane.f32.xlu0 %v1073
        %v1075 = vpop.xlane.xlu0 %1074
        %v1076 = vsub.f32 %v1072, %v1075
        %v1077 = vmul.f32 %v1076, 1.442695
        %v1078 = vpow.pop %v1077
        %v1079 = vsel %vm611, %v1078, 0.0
        %1080 = vadd.xlane.f32.xlu0 %v1079
        %v1081 = vpop.xlane.xlu0 %1080
        %v1082 = vrcp.pop %v1081
        %v1083 = vmul.f32 %v1078, %v1082
        %1084 = vst.msk [vmem:[%s413 + $0x5] sm:$0x1] %vm611, %v1083
        %v1085 = vld [vmem:[%s345 + $0x8] sm:$0xff]
        %v1086 = vld [vmem:[%s345 + $0x18] sm:$0xf]
        %1087 = vset.pattern.permute.xlu0 6
        %1088 = vperm.xlu0 %1087, %v478
        %v1089 = vpop.permute.xlu0 %1088
        %1091 = vset.pattern.permute.xlu0 6
        %1092 = vperm.xlu0 %1091, %v481
        %v1093 = vpop.permute.xlu0 %1092
        %1095 = vset.pattern.permute.xlu0 6
        %1096 = vperm.xlu0 %1095, %v484
        %v1097 = vpop.permute.xlu0 %1096
        %1099 = vset.pattern.permute.xlu0 6
        %1100 = vperm.xlu0 %1099, %v487
        %v1101 = vpop.permute.xlu0 %1100
        %1105 = vrot.lane.b32.xlu0 %v1085, 64
        %v1106 = vpop.permute.xlu0 %1105
        %1107 = vrot.lane.b32.xlu0 %v1086, 64
        %v1108 = vpop.permute.xlu0 %1107
        %v1109 = vsel %vm444, %v1106, 0
        %v1111 = vsel %vm444, %v1108, 0
        %1113 = vmatpush.xpose.msra.mxu0 0.0
        %1114 = vmatpush.xpose.msra.mxu0 0.0
        %1115 = vmatpush.xpose.msra.mxu0 0.0
        %1116 = vmatpush.xpose.msra.mxu0 0.0
        %1117 = vmatpush.xpose.msra.mxu0 0.0
        %1118 = vmatpush.xpose.msra.mxu0 0.0
        %1119 = vmatpush.xpose.msra.mxu0 0.0
        %1120 = vmatpush.xpose.msra.mxu0 0.0
        %1121 = vmatpush.xpose.msra.mxu0 0.0
        %1122 = vmatpush.xpose.msra.mxu0 0.0
        %1123 = vmatpush.xpose.msra.mxu0 0.0
        %1124 = vmatpush.xpose.msra.mxu0 0.0
        %1125 = vmatpush.xpose.msra.mxu0 0.0
        %1126 = vmatpush.xpose.msra.mxu0 0.0
        %1127 = vmatpush.xpose.msra.mxu0 %v1111
        %1128 = vmatpush.xpose.msra.mxu0 %v1109
        %1129 = vmatmul.f32.gmra.mxu0 %v520
        %v1130 = vpop.f32.mrf.mxu0
        %v1131 = vadd.f32 %v1089, %v1130
        %1132 = vmatmul.f32.gmra.mxu0 %v523
        %v1133 = vpop.f32.mrf.mxu0
        %v1134 = vadd.f32 %v1093, %v1133
        %1135 = vmatmul.f32.gmra.mxu0 %v526
        %v1136 = vpop.f32.mrf.mxu0
        %v1137 = vadd.f32 %v1097, %v1136
        %1138 = vmatmul.f32.gmra.mxu0 %v529
        %v1139 = vpop.f32.mrf.mxu0
        %v1140 = vadd.f32 %v1101, %v1139
        %1141 = vdwg.mxu0
        %v1142 = vtanh.pop %v1131
        %v1143 = vtanh.pop %v1134
        %v1144 = vtanh.pop %v1137
        %v1145 = vtanh.pop %v1140
        %v1146 = vmul.f32 %v1142, %v573
        %v1147 = vmul.f32 %v1143, %v578
        %v1148 = vmul.f32 %v1144, %v583
        %v1149 = vmul.f32 %v1145, %v588
        %v1150 = vsel %vm594, %v1146, 0.0
        %v1151 = vsel %vm594, %v1147, 0.0
        %v1152 = vadd.f32 %v1150, %v1151
        %v1153 = vsel %vm594, %v1148, 0.0
        %v1154 = vadd.f32 %v1152, %v1153
        %v1155 = vsel %vm594, %v1149, 0.0
        %v1156 = vadd.f32 %v1154, %v1155
        %v1157 = vrot.slane %v1156, 4
        %v1158 = vadd.f32 %v1156, %v1157
        %v1159 = vrot.slane %v1158, 2
        %v1160 = vadd.f32 %v1158, %v1159
        %v1161 = vrot.slane %v1160, 1
        %v1162 = vadd.f32 %v1160, %v1161
        %v1163 = vld [vmem:[%s373 + $0x6] sm:$0x1]
        %vm1164 = vcmp.eq.s32.totalorder %v1163, 0
        %v1165 = vsel %vm1164, -1e+10, %v1162
        %v1166 = vsel %vm611, %v1165, -inf
        %1167 = vmax.xlane.f32.xlu0 %v1166
        %v1168 = vpop.xlane.xlu0 %1167
        %v1169 = vsub.f32 %v1165, %v1168
        %v1170 = vmul.f32 %v1169, 1.442695
        %v1171 = vpow.pop %v1170
        %v1172 = vsel %vm611, %v1171, 0.0
        %1173 = vadd.xlane.f32.xlu0 %v1172
        %v1174 = vpop.xlane.xlu0 %1173
        %v1175 = vrcp.pop %v1174
        %v1176 = vmul.f32 %v1171, %v1175
        %1177 = vst.msk [vmem:[%s413 + $0x6] sm:$0x1] %vm611, %v1176
        %v1178 = vld [vmem:[%s345 + $0x8] sm:$0xff]
        %v1179 = vld [vmem:[%s345 + $0x18] sm:$0xf]
        %1180 = vset.pattern.permute.xlu0 7
        %1181 = vperm.xlu0 %1180, %v478
        %v1182 = vpop.permute.xlu0 %1181
        %1184 = vset.pattern.permute.xlu0 7
        %1185 = vperm.xlu0 %1184, %v481
        %v1186 = vpop.permute.xlu0 %1185
        %1188 = vset.pattern.permute.xlu0 7
        %1189 = vperm.xlu0 %1188, %v484
        %v1190 = vpop.permute.xlu0 %1189
        %1192 = vset.pattern.permute.xlu0 7
        %1193 = vperm.xlu0 %1192, %v487
        %v1194 = vpop.permute.xlu0 %1193
        %1198 = vrot.lane.b32.xlu0 %v1178, 32
        %v1199 = vpop.permute.xlu0 %1198
        %1200 = vrot.lane.b32.xlu0 %v1179, 32
        %v1201 = vpop.permute.xlu0 %1200
        %v1202 = vsel %vm444, %v1199, 0
        %v1204 = vsel %vm444, %v1201, 0
        %1206 = vmatpush.xpose.msra.mxu0 0.0
        %1207 = vmatpush.xpose.msra.mxu0 0.0
        %1208 = vmatpush.xpose.msra.mxu0 0.0
        %1209 = vmatpush.xpose.msra.mxu0 0.0
        %1210 = vmatpush.xpose.msra.mxu0 0.0
        %1211 = vmatpush.xpose.msra.mxu0 0.0
        %1212 = vmatpush.xpose.msra.mxu0 0.0
        %1213 = vmatpush.xpose.msra.mxu0 0.0
        %1214 = vmatpush.xpose.msra.mxu0 0.0
        %1215 = vmatpush.xpose.msra.mxu0 0.0
        %1216 = vmatpush.xpose.msra.mxu0 0.0
        %1217 = vmatpush.xpose.msra.mxu0 0.0
        %1218 = vmatpush.xpose.msra.mxu0 0.0
        %1219 = vmatpush.xpose.msra.mxu0 0.0
        %1220 = vmatpush.xpose.msra.mxu0 %v1204
        %1221 = vmatpush.xpose.msra.mxu0 %v1202
        %1222 = vmatmul.f32.gmra.mxu0 %v520
        %v1223 = vpop.f32.mrf.mxu0
        %v1224 = vadd.f32 %v1182, %v1223
        %1225 = vmatmul.f32.gmra.mxu0 %v523
        %v1226 = vpop.f32.mrf.mxu0
        %v1227 = vadd.f32 %v1186, %v1226
        %1228 = vmatmul.f32.gmra.mxu0 %v526
        %v1229 = vpop.f32.mrf.mxu0
        %v1230 = vadd.f32 %v1190, %v1229
        %1231 = vmatmul.f32.gmra.mxu0 %v529
        %v1232 = vpop.f32.mrf.mxu0
        %v1233 = vadd.f32 %v1194, %v1232
        %1234 = vdwg.mxu0
        %v1235 = vtanh.pop %v1224
        %v1236 = vtanh.pop %v1227
        %v1237 = vtanh.pop %v1230
        %v1238 = vtanh.pop %v1233
        %v1239 = vmul.f32 %v1235, %v573
        %v1240 = vmul.f32 %v1236, %v578
        %v1241 = vmul.f32 %v1237, %v583
        %v1242 = vmul.f32 %v1238, %v588
        %v1243 = vsel %vm594, %v1239, 0.0
        %v1244 = vsel %vm594, %v1240, 0.0
        %v1245 = vadd.f32 %v1243, %v1244
        %v1246 = vsel %vm594, %v1241, 0.0
        %v1247 = vadd.f32 %v1245, %v1246
        %v1248 = vsel %vm594, %v1242, 0.0
        %v1249 = vadd.f32 %v1247, %v1248
        %v1250 = vrot.slane %v1249, 4
        %v1251 = vadd.f32 %v1249, %v1250
        %v1252 = vrot.slane %v1251, 2
        %v1253 = vadd.f32 %v1251, %v1252
        %v1254 = vrot.slane %v1253, 1
        %v1255 = vadd.f32 %v1253, %v1254
        %v1256 = vld [vmem:[%s373 + $0x7] sm:$0x1]
        %vm1257 = vcmp.eq.s32.totalorder %v1256, 0
        %v1258 = vsel %vm1257, -1e+10, %v1255
        %v1259 = vsel %vm611, %v1258, -inf
        %1260 = vmax.xlane.f32.xlu0 %v1259
        %v1261 = vpop.xlane.xlu0 %1260
        %v1262 = vsub.f32 %v1258, %v1261
        %v1263 = vmul.f32 %v1262, 1.442695
        %v1264 = vpow.pop %v1263
        %v1265 = vsel %vm611, %v1264, 0.0
        %1266 = vadd.xlane.f32.xlu0 %v1265
        %v1267 = vpop.xlane.xlu0 %1266
        %v1268 = vrcp.pop %v1267
        %v1269 = vmul.f32 %v1264, %v1268
        %1270 = vst.msk [vmem:[%s413 + $0x7] sm:$0x1] %vm611, %v1269
        %s1271 = sand.u32 %s198, 1
        %s1272 = scalar_lea.sflag [#allocation5], %s1271
        %s1273 = sand.u32 %s198, 1
        %s1274 = smul.addr %s1273, 8
        %s1275 = scalar_lea.vmem [#allocation11], %s1274
        // Predicated region
        $region88: #{tpu_custom_call.1} parent=66 // pred_check
          %p1276 = pneg %p208
        $region89: #{tpu_custom_call.1} parent=66 // pred_check_branch
          %1278 = sbr.rel (%p1276) target = $region91
        $region90: #{tpu_custom_call.1} parent=66 // pred_region
          %1280 = vsyncadd %s1272, 0
          %s1281 = smul.addr %s28, 8
          %s1282 = scalar_lea.hbm %s7, %s1281
          %s1284 = sshll.u32 %s1275, 4
          %s1285 = int_to_ptr.vmem [resolvable:$true] %s1284
          %s1286 = sshll.u32 %s1282, 4
          %s1287 = int_to_ptr.hbm [resolvable:$true] %s1286
          %1289 = dma.vmem_to_hbm [thread:$0]  %s1285, 128, %s1287, %s1272
        $region91: #{tpu_custom_call.1} parent=66 // pred_fallthru
          _
      $region67: #{tpu_custom_call.1} parent=5 // pred_fallthru
        _
      %p1290 = scmp.le.s32.totalorder 2, %s23
      // Predicated region
      $region92: #{tpu_custom_call.1} parent=5 // pred_check
        %p1291 = pneg %p1290
      $region93: #{tpu_custom_call.1} parent=5 // pred_check_branch
        %1293 = sbr.rel (%p1291) target = $region95
      $region94: #{tpu_custom_call.1} parent=5 // pred_region
        %s1294 = ssub.s32 %s23, 2
        // Predicated region
        $region96: #{tpu_custom_call.1} parent=94 // pred_check
          %p1295 = pneg %p214
        $region97: #{tpu_custom_call.1} parent=94 // pred_check_branch
          %1297 = sbr.rel (%p1295) target = $region99
        $region98: #{tpu_custom_call.1} parent=94 // pred_region
          %s1298 = sand.u32 %s199, 1
          %s1299 = scalar_lea.sflag [#allocation5], %s1298
          %s1300 = sand.u32 %s199, 1
          %s1301 = smul.addr %s1300, 8
          %s1302 = scalar_lea.vmem [#allocation11], %s1301
          %1304 = dma.done %s1299, 128
        $region99: #{tpu_custom_call.1} parent=94 // pred_fallthru
          _
      $region95: #{tpu_custom_call.1} parent=5 // pred_fallthru
        _
    $region6: #{tpu_custom_call.1} parent=1 // loop_footer
      %s27 = sadd.s32 1, %s23
    $region7: #{tpu_custom_call.1} parent=1 // loop_footer_branch
      %22 = sbr.rel target = $region3
    $region8: #{tpu_custom_call.1} parent=1 // loop_exit
      _
    %1305 = vsyncpa [#allocation4], 1
    %s1306 = scalar_lea.sflag [#allocation4], 1
    %1307 = vsyncpa %s1306, 1
    %1308 = vsyncpa [#allocation7], 1
    %1309 = vsyncpa [#allocation10], 1
    %s1310 = scalar_lea.sflag [#allocation10], 1
    %1311 = vsyncpa %s1310, 1
    %1312 = vsyncpa [#allocation5], 1
    %s1313 = scalar_lea.sflag [#allocation5], 1
    %1314 = vsyncpa %s1313, 1

</llo_original>
